<compile_context>
chip_gen: v5e
topology: v5e:2x2
jax: 0.10.0
libtpu: 0.0.40
codegen_flags: <defaults>
</compile_context>

<pallas_src>
import functools

import jax
import jax.numpy as jnp
from jax import lax
from jax.experimental import pallas as pl
from jax.experimental.pallas import tpu as pltpu

_EPS_LN = 1e-5          # torch.nn.LayerNorm default eps
_EPS_BN = 1e-5          # torch.nn.BatchNorm1d default eps
_N_SCAL_PER_CYP = 8     # scalars packed per CYP into the SMEM vector
_MAX_ROWS_PER_BLOCK = 1024


def _prelu(x, alpha):
    return jnp.where(x >= 0, x, alpha * x)


# ---------------------------------------------------------------------------
# Fused kernel (whole forward, one pallas_call)
# ---------------------------------------------------------------------------
def _make_fused_kernel(n_cyp, n_classes, channels):
    C = channels
    nc = n_classes
    T = n_cyp * nc
    inv_cp1 = 1.0 / float(C + 1)

    def kernel(scal_ref, x_ref, *refs):
        o_ref = refs[-1]
        it = iter(refs[:-1])

        def nxt():
            return next(it)[...]

        # ---------------- proj_edge: Linear -> PReLU -> Linear ----------------
        pe_alpha = scal_ref[0]
        x = x_ref[...]
        pe_w1, pe_b1, pe_w2, pe_b2 = nxt(), nxt(), nxt(), nxt()
        h = jnp.dot(x, pe_w1, preferred_element_type=jnp.float32) + pe_b1
        h = _prelu(h, pe_alpha)
        h = jnp.dot(h, pe_w2, preferred_element_type=jnp.float32) + pe_b2

        rows = h.shape[0]
        col = lax.broadcasted_iota(jnp.int32, (1, T), 1)
        acc = jnp.zeros((rows, T), jnp.float32)

        for ci in range(n_cyp):
            base = 1 + ci * _N_SCAL_PER_CYP
            r_a1 = scal_ref[base + 0]      # reaction attn PReLU alpha
            r_a2 = scal_ref[base + 1]      # reaction fc PReLU alpha
            r_b2 = scal_ref[base + 2]      # reaction fc2 bias (scalar, n_out=1)
            s_a1 = scal_ref[base + 3]      # subtype attn PReLU alpha
            s_a2 = scal_ref[base + 4]      # subtype fc PReLU alpha
            s_wa_pp = scal_ref[base + 5]   # subtype attn_w[C, C] (prob->prob)
            s_w1_pp = scal_ref[base + 6]   # subtype folded fc1_w[C, C]
            s_b1_p = scal_ref[base + 7]    # subtype folded fc1_b[C]

            # ------------------------- reaction head -------------------------
            r_attn_w = nxt(); r_fc1_w = nxt(); r_fc1_b = nxt(); r_fc2_row = nxt()

            a = jnp.dot(h, r_attn_w, preferred_element_type=jnp.float32)
            a = jnp.tanh(_prelu(a, r_a1))
            mx = h * a
            mean = jnp.mean(mx, axis=-1, keepdims=True)
            var = jnp.mean((mx - mean) ** 2, axis=-1, keepdims=True)
            z = (mx - mean) * lax.rsqrt(var + _EPS_LN)      # LN affine folded in fc1
            f = jnp.dot(z, r_fc1_w, preferred_element_type=jnp.float32) + r_fc1_b
            f = _prelu(f, r_a2)
            r_logit = jnp.sum(f * r_fc2_row, axis=-1, keepdims=True) + r_b2  # (rows,1)
            p = 1.0 / (1.0 + jnp.exp(-r_logit))                              # sigmoid

            # place reaction logit into column ci*nc of the lane-dense slab
            acc = acc + jnp.where(col == ci * nc, r_logit, 0.0)

            # --------- subtype head on [h, p] (row-split; no C+1 arrays) ------
            s_Wa_hh = nxt(); s_wa_hp = nxt(); s_wa_ph = nxt()     # (C,C),(1,C),(1,C)
            s_W1_hh = nxt(); s_w1_hp = nxt(); s_w1_ph = nxt(); s_b1_h = nxt()
            s_W2_g = nxt(); s_w2p_g = nxt()                       # (C,T),(1,T)

            # attn branch (Linear no-bias -> PReLU -> Tanh), split into C cols + 1 col
            A_h = jnp.dot(h, s_Wa_hh, preferred_element_type=jnp.float32) + p * s_wa_ph
            A_p = jnp.sum(h * s_wa_hp, axis=-1, keepdims=True) + p * s_wa_pp
            g_h = jnp.tanh(_prelu(A_h, s_a1))
            g_p = jnp.tanh(_prelu(A_p, s_a1))
            m_h = h * g_h                     # (rows, C)
            m_p = p * g_p                     # (rows, 1)

            # LayerNorm stats over all C+1 features (prob column handled analytically)
            tot = jnp.sum(m_h, axis=-1, keepdims=True) + m_p
            mean = tot * inv_cp1
            sq = jnp.sum((m_h - mean) ** 2, axis=-1, keepdims=True) + (m_p - mean) ** 2
            inv = lax.rsqrt(sq * inv_cp1 + _EPS_LN)
            z_h = (m_h - mean) * inv          # LN affine folded into fc1 below
            z_p = (m_p - mean) * inv

            # fc1 (+ folded LN affine + folded BatchNorm), split, then PReLU
            f_h = (jnp.dot(z_h, s_W1_hh, preferred_element_type=jnp.float32)
                   + z_p * s_w1_ph + s_b1_h)
            f_p = jnp.sum(z_h * s_w1_hp, axis=-1, keepdims=True) + z_p * s_w1_pp + s_b1_p
            f_h = _prelu(f_h, s_a2)
            f_p = _prelu(f_p, s_a2)

            # fc2 directly into this head's columns of the (rows, T) slab
            acc = (acc
                   + jnp.dot(f_h, s_W2_g, preferred_element_type=jnp.float32)
                   + f_p * s_w2p_g)

        b_g = nxt()                  # (1, T) stacked subtype fc2 biases
        o_ref[...] = acc + b_g       # single lane-dense store

    return kernel


# ---------------------------------------------------------------------------
# Parameter packing (host-side, once): BN fold, LN-affine fold, weight splits
# ---------------------------------------------------------------------------
def _fold_bn(fc1_w, fc1_b, bn_g, bn_b, bn_m, bn_v):
    """Fold eval-mode BatchNorm1d into the preceding Linear."""
    scale = bn_g * lax.rsqrt(bn_v + _EPS_BN)
    return fc1_w * scale[None, :], fc1_b * scale + (bn_b - bn_m * scale)


def _fold_ln_affine(ln_g, ln_b, fc1_w, fc1_b):
    """Fold LayerNorm's gamma/beta into the following (already BN-folded) Linear."""
    new_b = ln_b @ fc1_w + fc1_b
    new_w = ln_g[:, None] * fc1_w
    return new_w, new_b


def _row(v):
    return jnp.asarray(v, jnp.float32).reshape(1, -1)


def pack_params(params, cyp_list, n_classes):
    pe = params["proj_edge"]
    C = pe["w1"].shape[0]
    nc = n_classes
    n_cyp = len(cyp_list)
    T = n_cyp * nc

    scalars = [pe["alpha"]]
    tensors = [pe["w1"], _row(pe["b1"]), pe["w2"], _row(pe["b2"])]
    b_g = jnp.zeros((1, T), jnp.float32)

    for ci, cyp in enumerate(cyp_list):
        # ---- reaction head (input dim C, output dim 1) ----
        r = params["reaction_head"][cyp]
        rw, rb = _fold_bn(r["fc1_w"], r["fc1_b"],
                          r["bn_g"], r["bn_b"], r["bn_m"], r["bn_v"])
        rw, rb = _fold_ln_affine(r["ln_g"], r["ln_b"], rw, rb)
        scalars += [r["alpha1"], r["alpha2"], r["fc2_b"][0]]
        tensors += [r["attn_w"], rw, _row(rb), _row(r["fc2_w"][:, 0])]

        # ---- subtype head (input dim C+1, split into C "h" rows + prob row) ----
        s = params["subtype_head"][cyp]
        sw, sb = _fold_bn(s["fc1_w"], s["fc1_b"],
                          s["bn_g"], s["bn_b"], s["bn_m"], s["bn_v"])
        sw, sb = _fold_ln_affine(s["ln_g"], s["ln_b"], sw, sb)
        Wa = s["attn_w"]                       # (C+1, C+1)
        W2 = s["fc2_w"]                        # (C+1, nc-1)
        scalars += [s["alpha1"], s["alpha2"], Wa[C, C], sw[C, C], sb[C]]

        Ws_g = jnp.zeros((C, T), jnp.float32).at[:, ci * nc + 1:(ci + 1) * nc].set(W2[:C, :])
        wp_g = jnp.zeros((1, T), jnp.float32).at[0, ci * nc + 1:(ci + 1) * nc].set(W2[C, :])
        b_g = b_g.at[0, ci * nc + 1:(ci + 1) * nc].set(s["fc2_b"])

        tensors += [Wa[:C, :C], _row(Wa[:C, C]), _row(Wa[C, :C]),
                    sw[:C, :C], _row(sw[:C, C]), _row(sw[C, :C]), _row(sb[:C]),
                    Ws_g, wp_g]

    tensors.append(b_g)
    scalars = jnp.stack([jnp.asarray(v, jnp.float32).reshape(()) for v in scalars])
    return scalars, tensors


# ---------------------------------------------------------------------------
# Forward wrapper: ONE pallas_call for the whole model
# ---------------------------------------------------------------------------
@functools.partial(jax.jit, static_argnames=("cyp_list", "n_classes"))
def som_predictor_v2_forward(x, scalars, tensors, *, cyp_list, n_classes):
    n, C = x.shape
    n_cyp = len(cyp_list)
    T = n_cyp * n_classes
    bn = n if n <= _MAX_ROWS_PER_BLOCK else _MAX_ROWS_PER_BLOCK
    grid = (pl.cdiv(n, bn),)

    kernel = _make_fused_kernel(n_cyp, n_classes, C)

    in_specs = [pl.BlockSpec(memory_space=pltpu.MemorySpace.SMEM),   # packed scalars
                pl.BlockSpec((bn, C), lambda i: (i, 0))]             # activations
    # weights: whole-array blocks with constant index_maps -> stay VMEM-resident
    in_specs += [pl.BlockSpec(t.shape, lambda i: (0, 0)) for t in tensors]
    out_specs = pl.BlockSpec((bn, T), lambda i: (i, 0))              # lane-dense slab

    slab = pl.pallas_call(
        kernel,
        out_shape=jax.ShapeDtypeStruct((n, T), jnp.float32),
        grid=grid,
        in_specs=in_specs,
        out_specs=out_specs,
        compiler_params=pltpu.CompilerParams(dimension_semantics=("parallel",)),
    )(scalars, x, *tensors)

    return {cyp: slab[:, ci * n_classes:(ci + 1) * n_classes]
            for ci, cyp in enumerate(cyp_list)}


# ---------------------------------------------------------------------------
# Deterministic synthetic parameters (no checkpoint loading)
# ---------------------------------------------------------------------------
def _init_linear(key, fan_in, fan_out, bias=True):
    k1, k2 = jax.random.split(key)
    bound = float(fan_in) ** -0.5
    w = jax.random.uniform(k1, (fan_in, fan_out), jnp.float32, -bound, bound)
    if not bias:
        return w, None
    b = jax.random.uniform(k2, (fan_out,), jnp.float32, -bound, bound)
    return w, b


def _init_attention(key, c_in, n_out):
    ks = jax.random.split(key, 9)
    attn_w, _ = _init_linear(ks[0], c_in, c_in, bias=False)
    fc1_w, fc1_b = _init_linear(ks[1], c_in, c_in)
    fc2_w, fc2_b = _init_linear(ks[2], c_in, n_out)
    return {
        "attn_w": attn_w,
        "alpha1": jnp.float32(0.05),
        "ln_g": 1.0 + 0.1 * jax.random.normal(ks[3], (c_in,), jnp.float32),
        "ln_b": 0.1 * jax.random.normal(ks[4], (c_in,), jnp.float32),
        "fc1_w": fc1_w, "fc1_b": fc1_b,
        "bn_g": 1.0 + 0.1 * jax.random.normal(ks[5], (c_in,), jnp.float32),
        "bn_b": 0.1 * jax.random.normal(ks[6], (c_in,), jnp.float32),
        "bn_m": 0.1 * jax.random.normal(ks[7], (c_in,), jnp.float32),
        "bn_v": jax.random.uniform(ks[8], (c_in,), jnp.float32, 0.5, 1.5),
        "alpha2": jnp.float32(0.05),
        "fc2_w": fc2_w, "fc2_b": fc2_b,
    }


def init_params(key, channels, n_classes, cyp_list):
    k_pe, k_heads = jax.random.split(key)
    k1, k2 = jax.random.split(k_pe)
    w1, b1 = _init_linear(k1, channels, channels)
    w2, b2 = _init_linear(k2, channels, channels)
    params = {
        "proj_edge": {"w1": w1, "b1": b1, "w2": w2, "b2": b2,
                      "alpha": jnp.float32(0.05)},
        "reaction_head": {},
        "subtype_head": {},
    }
    head_keys = jax.random.split(k_heads, 2 * len(cyp_list))
    for i, cyp in enumerate(cyp_list):
        params["reaction_head"][cyp] = _init_attention(head_keys[2 * i], channels, 1)
        params["subtype_head"][cyp] = _init_attention(head_keys[2 * i + 1],
                                                      channels + 1, n_classes - 1)
    return params


# ---------------------------------------------------------------------------
# Pure-JAX reference (literal torch eval-mode math) for the sanity check
# ---------------------------------------------------------------------------
def _ref_attention(x, p):
    a = x @ p["attn_w"]
    a = jnp.tanh(jnp.where(a >= 0, a, p["alpha1"] * a))
    mx = x * a
    mean = mx.mean(-1, keepdims=True)
    var = ((mx - mean) ** 2).mean(-1, keepdims=True)
    h = (mx - mean) / jnp.sqrt(var + _EPS_LN) * p["ln_g"] + p["ln_b"]
    h = h @ p["fc1_w"] + p["fc1_b"]
    h = (h - p["bn_m"]) / jnp.sqrt(p["bn_v"] + _EPS_BN) * p["bn_g"] + p["bn_b"]
    h = jnp.where(h >= 0, h, p["alpha2"] * h)
    return h @ p["fc2_w"] + p["fc2_b"]


def _ref_forward(x, params, cyp_list):
    pe = params["proj_edge"]
    h = x @ pe["w1"] + pe["b1"]
    h = jnp.where(h >= 0, h, pe["alpha"] * h)
    h = h @ pe["w2"] + pe["b2"]
    logits = {}
    for cyp in cyp_list:
        rl = _ref_attention(h, params["reaction_head"][cyp])
        si = jnp.concatenate([h, jax.nn.sigmoid(rl)], axis=-1)
        sl = _ref_attention(si, params["subtype_head"][cyp])
        logits[cyp] = jnp.concatenate([rl, sl], axis=-1)
    return logits


# ---------------------------------------------------------------------------
if __name__ == "__main__":
    N, C, N_CLASSES = 16, 32, 3
    CYP_LIST = ("CYP3A4", "CYP2D6")

    key = jax.random.PRNGKey(0)
    k_x, k_p = jax.random.split(key)
    x = jax.random.normal(k_x, (N, C), jnp.float32)
    params = init_params(k_p, C, N_CLASSES, CYP_LIST)

    scalars, tensors = pack_params(params, CYP_LIST, N_CLASSES)   # one-time prep
    out = som_predictor_v2_forward(x, scalars, tensors,
                                   cyp_list=CYP_LIST, n_classes=N_CLASSES)
    out = jax.tree_util.tree_map(jax.block_until_ready, out)

    ref = _ref_forward(x, params, CYP_LIST)
    for cyp in CYP_LIST:
        assert out[cyp].shape == (N, N_CLASSES), out[cyp].shape
        assert jnp.allclose(out[cyp], ref[cyp], atol=3e-4, rtol=3e-4), cyp

    print("KERNEL_OK")
</pallas_src>

<mosaic_0001>
module attributes {stable_mosaic.version = 11 : i64} {
  func.func @kernel(%arg0: i32, %arg1: memref<17xf32, #tpu.memory_space<smem>>, %arg2: memref<16x32xf32, #tpu.memory_space<vmem>>, %arg3: memref<32x32xf32, #tpu.memory_space<vmem>>, %arg4: memref<1x32xf32, #tpu.memory_space<vmem>>, %arg5: memref<32x32xf32, #tpu.memory_space<vmem>>, %arg6: memref<1x32xf32, #tpu.memory_space<vmem>>, %arg7: memref<32x32xf32, #tpu.memory_space<vmem>>, %arg8: memref<32x32xf32, #tpu.memory_space<vmem>>, %arg9: memref<1x32xf32, #tpu.memory_space<vmem>>, %arg10: memref<1x32xf32, #tpu.memory_space<vmem>>, %arg11: memref<32x32xf32, #tpu.memory_space<vmem>>, %arg12: memref<1x32xf32, #tpu.memory_space<vmem>>, %arg13: memref<1x32xf32, #tpu.memory_space<vmem>>, %arg14: memref<32x32xf32, #tpu.memory_space<vmem>>, %arg15: memref<1x32xf32, #tpu.memory_space<vmem>>, %arg16: memref<1x32xf32, #tpu.memory_space<vmem>>, %arg17: memref<1x32xf32, #tpu.memory_space<vmem>>, %arg18: memref<32x6xf32, #tpu.memory_space<vmem>>, %arg19: memref<1x6xf32, #tpu.memory_space<vmem>>, %arg20: memref<32x32xf32, #tpu.memory_space<vmem>>, %arg21: memref<32x32xf32, #tpu.memory_space<vmem>>, %arg22: memref<1x32xf32, #tpu.memory_space<vmem>>, %arg23: memref<1x32xf32, #tpu.memory_space<vmem>>, %arg24: memref<32x32xf32, #tpu.memory_space<vmem>>, %arg25: memref<1x32xf32, #tpu.memory_space<vmem>>, %arg26: memref<1x32xf32, #tpu.memory_space<vmem>>, %arg27: memref<32x32xf32, #tpu.memory_space<vmem>>, %arg28: memref<1x32xf32, #tpu.memory_space<vmem>>, %arg29: memref<1x32xf32, #tpu.memory_space<vmem>>, %arg30: memref<1x32xf32, #tpu.memory_space<vmem>>, %arg31: memref<32x6xf32, #tpu.memory_space<vmem>>, %arg32: memref<1x6xf32, #tpu.memory_space<vmem>>, %arg33: memref<1x6xf32, #tpu.memory_space<vmem>>, %arg34: memref<16x6xf32, #tpu.memory_space<vmem>>) attributes {dimension_semantics = [#tpu.dimension_semantics<parallel>], iteration_bounds = array<i64: 1>, scalar_prefetch = 0 : i64, scratch_operands = 0 : i64, tpu.core_type = #tpu.core_type<tc>, window_params = [{transform_indices = @transform_0, window_bounds = array<i64: 17>}, {transform_indices = @transform_1, window_bounds = array<i64: 16, 32>}, {pipeline_mode = #tpu.pipeline_mode<synchronous>, transform_indices = @transform_2, window_bounds = array<i64: 32, 32>}, {pipeline_mode = #tpu.pipeline_mode<synchronous>, transform_indices = @transform_3, window_bounds = array<i64: 1, 32>}, {pipeline_mode = #tpu.pipeline_mode<synchronous>, transform_indices = @transform_4, window_bounds = array<i64: 32, 32>}, {pipeline_mode = #tpu.pipeline_mode<synchronous>, transform_indices = @transform_5, window_bounds = array<i64: 1, 32>}, {pipeline_mode = #tpu.pipeline_mode<synchronous>, transform_indices = @transform_6, window_bounds = array<i64: 32, 32>}, {pipeline_mode = #tpu.pipeline_mode<synchronous>, transform_indices = @transform_7, window_bounds = array<i64: 32, 32>}, {pipeline_mode = #tpu.pipeline_mode<synchronous>, transform_indices = @transform_8, window_bounds = array<i64: 1, 32>}, {pipeline_mode = #tpu.pipeline_mode<synchronous>, transform_indices = @transform_9, window_bounds = array<i64: 1, 32>}, {pipeline_mode = #tpu.pipeline_mode<synchronous>, transform_indices = @transform_10, window_bounds = array<i64: 32, 32>}, {pipeline_mode = #tpu.pipeline_mode<synchronous>, transform_indices = @transform_11, window_bounds = array<i64: 1, 32>}, {pipeline_mode = #tpu.pipeline_mode<synchronous>, transform_indices = @transform_12, window_bounds = array<i64: 1, 32>}, {pipeline_mode = #tpu.pipeline_mode<synchronous>, transform_indices = @transform_13, window_bounds = array<i64: 32, 32>}, {pipeline_mode = #tpu.pipeline_mode<synchronous>, transform_indices = @transform_14, window_bounds = array<i64: 1, 32>}, {pipeline_mode = #tpu.pipeline_mode<synchronous>, transform_indices = @transform_15, window_bounds = array<i64: 1, 32>}, {pipeline_mode = #tpu.pipeline_mode<synchronous>, transform_indices = @transform_16, window_bounds = array<i64: 1, 32>}, {pipeline_mode = #tpu.pipeline_mode<synchronous>, transform_indices = @transform_17, window_bounds = array<i64: 32, 6>}, {pipeline_mode = #tpu.pipeline_mode<synchronous>, transform_indices = @transform_18, window_bounds = array<i64: 1, 6>}, {pipeline_mode = #tpu.pipeline_mode<synchronous>, transform_indices = @transform_19, window_bounds = array<i64: 32, 32>}, {pipeline_mode = #tpu.pipeline_mode<synchronous>, transform_indices = @transform_20, window_bounds = array<i64: 32, 32>}, {pipeline_mode = #tpu.pipeline_mode<synchronous>, transform_indices = @transform_21, window_bounds = array<i64: 1, 32>}, {pipeline_mode = #tpu.pipeline_mode<synchronous>, transform_indices = @transform_22, window_bounds = array<i64: 1, 32>}, {pipeline_mode = #tpu.pipeline_mode<synchronous>, transform_indices = @transform_23, window_bounds = array<i64: 32, 32>}, {pipeline_mode = #tpu.pipeline_mode<synchronous>, transform_indices = @transform_24, window_bounds = array<i64: 1, 32>}, {pipeline_mode = #tpu.pipeline_mode<synchronous>, transform_indices = @transform_25, window_bounds = array<i64: 1, 32>}, {pipeline_mode = #tpu.pipeline_mode<synchronous>, transform_indices = @transform_26, window_bounds = array<i64: 32, 32>}, {pipeline_mode = #tpu.pipeline_mode<synchronous>, transform_indices = @transform_27, window_bounds = array<i64: 1, 32>}, {pipeline_mode = #tpu.pipeline_mode<synchronous>, transform_indices = @transform_28, window_bounds = array<i64: 1, 32>}, {pipeline_mode = #tpu.pipeline_mode<synchronous>, transform_indices = @transform_29, window_bounds = array<i64: 1, 32>}, {pipeline_mode = #tpu.pipeline_mode<synchronous>, transform_indices = @transform_30, window_bounds = array<i64: 32, 6>}, {pipeline_mode = #tpu.pipeline_mode<synchronous>, transform_indices = @transform_31, window_bounds = array<i64: 1, 6>}, {pipeline_mode = #tpu.pipeline_mode<synchronous>, transform_indices = @transform_32, window_bounds = array<i64: 1, 6>}, {transform_indices = @transform_33, window_bounds = array<i64: 16, 6>}]} {
    %c0 = arith.constant 0 : index
    %0 = memref.load %arg1[%c0] : memref<17xf32, #tpu.memory_space<smem>>
    %c0_0 = arith.constant 0 : index
    %c0_1 = arith.constant 0 : index
    %1 = vector.load %arg2[%c0_0, %c0_1] : memref<16x32xf32, #tpu.memory_space<vmem>>, vector<16x32xf32>
    %c0_2 = arith.constant 0 : index
    %c0_3 = arith.constant 0 : index
    %2 = vector.load %arg3[%c0_2, %c0_3] : memref<32x32xf32, #tpu.memory_space<vmem>>, vector<32x32xf32>
    %c0_4 = arith.constant 0 : index
    %c0_5 = arith.constant 0 : index
    %3 = vector.load %arg4[%c0_4, %c0_5] : memref<1x32xf32, #tpu.memory_space<vmem>>, vector<1x32xf32>
    %c0_6 = arith.constant 0 : index
    %c0_7 = arith.constant 0 : index
    %4 = vector.load %arg5[%c0_6, %c0_7] : memref<32x32xf32, #tpu.memory_space<vmem>>, vector<32x32xf32>
    %c0_8 = arith.constant 0 : index
    %c0_9 = arith.constant 0 : index
    %5 = vector.load %arg6[%c0_8, %c0_9] : memref<1x32xf32, #tpu.memory_space<vmem>>, vector<1x32xf32>
    %cst = arith.constant dense<0.000000e+00> : vector<16x32xf32>
    %6 = tpu.matmul %1, %2, %cst {dimension_numbers = #tpu.dot_dimension_numbers<[1], [0], [0], [1], [0, 0, 1, 1], [], []>} : vector<16x32xf32>, vector<32x32xf32>, vector<16x32xf32> -> vector<16x32xf32>
    %7 = vector.broadcast %3 : vector<1x32xf32> to vector<16x32xf32>
    %8 = arith.addf %6, %7 : vector<16x32xf32>
    %cst_10 = arith.constant 0.000000e+00 : f32
    %9 = vector.broadcast %cst_10 : f32 to vector<16x32xf32>
    %10 = arith.cmpf oge, %8, %9 : vector<16x32xf32>
    %11 = vector.broadcast %0 : f32 to vector<16x32xf32>
    %12 = arith.mulf %11, %8 : vector<16x32xf32>
    %13 = arith.select %10, %8, %12 : vector<16x32xi1>, vector<16x32xf32>
    %cst_11 = arith.constant dense<0.000000e+00> : vector<16x32xf32>
    %14 = tpu.matmul %13, %4, %cst_11 {dimension_numbers = #tpu.dot_dimension_numbers<[1], [0], [0], [1], [0, 0, 1, 1], [], []>} : vector<16x32xf32>, vector<32x32xf32>, vector<16x32xf32> -> vector<16x32xf32>
    %15 = vector.broadcast %5 : vector<1x32xf32> to vector<16x32xf32>
    %16 = arith.addf %14, %15 : vector<16x32xf32>
    %17 = tpu.iota {dimensions = array<i32: 1>} : vector<1x6xi32>
    %cst_12 = arith.constant 0.000000e+00 : f32
    %18 = vector.broadcast %cst_12 : f32 to vector<16x6xf32>
    %c1 = arith.constant 1 : index
    %19 = memref.load %arg1[%c1] : memref<17xf32, #tpu.memory_space<smem>>
    %c2 = arith.constant 2 : index
    %20 = memref.load %arg1[%c2] : memref<17xf32, #tpu.memory_space<smem>>
    %c3 = arith.constant 3 : index
    %21 = memref.load %arg1[%c3] : memref<17xf32, #tpu.memory_space<smem>>
    %c4 = arith.constant 4 : index
    %22 = memref.load %arg1[%c4] : memref<17xf32, #tpu.memory_space<smem>>
    %c5 = arith.constant 5 : index
    %23 = memref.load %arg1[%c5] : memref<17xf32, #tpu.memory_space<smem>>
    %c6 = arith.constant 6 : index
    %24 = memref.load %arg1[%c6] : memref<17xf32, #tpu.memory_space<smem>>
    %c7 = arith.constant 7 : index
    %25 = memref.load %arg1[%c7] : memref<17xf32, #tpu.memory_space<smem>>
    %c8 = arith.constant 8 : index
    %26 = memref.load %arg1[%c8] : memref<17xf32, #tpu.memory_space<smem>>
    %c0_13 = arith.constant 0 : index
    %c0_14 = arith.constant 0 : index
    %27 = vector.load %arg7[%c0_13, %c0_14] : memref<32x32xf32, #tpu.memory_space<vmem>>, vector<32x32xf32>
    %c0_15 = arith.constant 0 : index
    %c0_16 = arith.constant 0 : index
    %28 = vector.load %arg8[%c0_15, %c0_16] : memref<32x32xf32, #tpu.memory_space<vmem>>, vector<32x32xf32>
    %c0_17 = arith.constant 0 : index
    %c0_18 = arith.constant 0 : index
    %29 = vector.load %arg9[%c0_17, %c0_18] : memref<1x32xf32, #tpu.memory_space<vmem>>, vector<1x32xf32>
    %c0_19 = arith.constant 0 : index
    %c0_20 = arith.constant 0 : index
    %30 = vector.load %arg10[%c0_19, %c0_20] : memref<1x32xf32, #tpu.memory_space<vmem>>, vector<1x32xf32>
    %cst_21 = arith.constant dense<0.000000e+00> : vector<16x32xf32>
    %31 = tpu.matmul %16, %27, %cst_21 {dimension_numbers = #tpu.dot_dimension_numbers<[1], [0], [0], [1], [0, 0, 1, 1], [], []>} : vector<16x32xf32>, vector<32x32xf32>, vector<16x32xf32> -> vector<16x32xf32>
    %cst_22 = arith.constant 0.000000e+00 : f32
    %32 = vector.broadcast %cst_22 : f32 to vector<16x32xf32>
    %33 = arith.cmpf oge, %31, %32 : vector<16x32xf32>
    %34 = vector.broadcast %19 : f32 to vector<16x32xf32>
    %35 = arith.mulf %34, %31 : vector<16x32xf32>
    %36 = arith.select %33, %31, %35 : vector<16x32xi1>, vector<16x32xf32>
    %37 = math.tanh %36 : vector<16x32xf32>
    %38 = arith.mulf %16, %37 : vector<16x32xf32>
    %cst_23 = arith.constant dense<0.000000e+00> : vector<16xf32>
    %39 = vector.multi_reduction <add>, %38, %cst_23 [1] : vector<16x32xf32> to vector<16xf32>
    %40 = vector.shape_cast %39 : vector<16xf32> to vector<16x1xf32>
    %cst_24 = arith.constant 3.200000e+01 : f32
    %41 = vector.broadcast %cst_24 : f32 to vector<16x1xf32>
    %42 = arith.divf %40, %41 : vector<16x1xf32>
    %43 = vector.broadcast %42 : vector<16x1xf32> to vector<16x32xf32>
    %44 = arith.subf %38, %43 : vector<16x32xf32>
    %45 = arith.mulf %44, %44 : vector<16x32xf32>
    %cst_25 = arith.constant dense<0.000000e+00> : vector<16xf32>
    %46 = vector.multi_reduction <add>, %45, %cst_25 [1] : vector<16x32xf32> to vector<16xf32>
    %47 = vector.shape_cast %46 : vector<16xf32> to vector<16x1xf32>
    %cst_26 = arith.constant 3.200000e+01 : f32
    %48 = vector.broadcast %cst_26 : f32 to vector<16x1xf32>
    %49 = arith.divf %47, %48 : vector<16x1xf32>
    %50 = vector.broadcast %42 : vector<16x1xf32> to vector<16x32xf32>
    %51 = arith.subf %38, %50 : vector<16x32xf32>
    %cst_27 = arith.constant 9.99999974E-6 : f32
    %52 = vector.broadcast %cst_27 : f32 to vector<16x1xf32>
    %53 = arith.addf %49, %52 : vector<16x1xf32>
    %54 = math.rsqrt %53 : vector<16x1xf32>
    %55 = vector.broadcast %54 : vector<16x1xf32> to vector<16x32xf32>
    %56 = arith.mulf %51, %55 : vector<16x32xf32>
    %cst_28 = arith.constant dense<0.000000e+00> : vector<16x32xf32>
    %57 = tpu.matmul %56, %28, %cst_28 {dimension_numbers = #tpu.dot_dimension_numbers<[1], [0], [0], [1], [0, 0, 1, 1], [], []>} : vector<16x32xf32>, vector<32x32xf32>, vector<16x32xf32> -> vector<16x32xf32>
    %58 = vector.broadcast %29 : vector<1x32xf32> to vector<16x32xf32>
    %59 = arith.addf %57, %58 : vector<16x32xf32>
    %cst_29 = arith.constant 0.000000e+00 : f32
    %60 = vector.broadcast %cst_29 : f32 to vector<16x32xf32>
    %61 = arith.cmpf oge, %59, %60 : vector<16x32xf32>
    %62 = vector.broadcast %20 : f32 to vector<16x32xf32>
    %63 = arith.mulf %62, %59 : vector<16x32xf32>
    %64 = arith.select %61, %59, %63 : vector<16x32xi1>, vector<16x32xf32>
    %65 = vector.broadcast %30 : vector<1x32xf32> to vector<16x32xf32>
    %66 = arith.mulf %64, %65 : vector<16x32xf32>
    %cst_30 = arith.constant dense<0.000000e+00> : vector<16xf32>
    %67 = vector.multi_reduction <add>, %66, %cst_30 [1] : vector<16x32xf32> to vector<16xf32>
    %68 = vector.shape_cast %67 : vector<16xf32> to vector<16x1xf32>
    %69 = vector.broadcast %21 : f32 to vector<16x1xf32>
    %70 = arith.addf %68, %69 : vector<16x1xf32>
    %cst_31 = arith.constant 0.000000e+00 : f32
    %71 = vector.broadcast %cst_31 : f32 to vector<16x1xf32>
    %72 = arith.subf %71, %70 : vector<16x1xf32>
    %73 = math.exp %72 : vector<16x1xf32>
    %cst_32 = arith.constant 1.000000e+00 : f32
    %74 = vector.broadcast %cst_32 : f32 to vector<16x1xf32>
    %75 = arith.addf %74, %73 : vector<16x1xf32>
    %cst_33 = arith.constant 1.000000e+00 : f32
    %76 = vector.broadcast %cst_33 : f32 to vector<16x1xf32>
    %77 = arith.divf %76, %75 : vector<16x1xf32>
    %c0_i32 = arith.constant 0 : i32
    %78 = vector.broadcast %c0_i32 : i32 to vector<1x6xi32>
    %79 = arith.cmpi eq, %17, %78 : vector<1x6xi32>
    %cst_34 = arith.constant 0.000000e+00 : f32
    %80 = vector.shape_cast %79 : vector<1x6xi1> to vector<1x6xi1>
    %81 = vector.broadcast %80 : vector<1x6xi1> to vector<16x6xi1>
    %82 = vector.shape_cast %70 : vector<16x1xf32> to vector<16x1xf32>
    %83 = vector.broadcast %82 : vector<16x1xf32> to vector<16x6xf32>
    %84 = vector.broadcast %cst_34 : f32 to vector<16x6xf32>
    %85 = arith.select %81, %83, %84 : vector<16x6xi1>, vector<16x6xf32>
    %86 = arith.addf %18, %85 : vector<16x6xf32>
    %c0_35 = arith.constant 0 : index
    %c0_36 = arith.constant 0 : index
    %87 = vector.load %arg11[%c0_35, %c0_36] : memref<32x32xf32, #tpu.memory_space<vmem>>, vector<32x32xf32>
    %c0_37 = arith.constant 0 : index
    %c0_38 = arith.constant 0 : index
    %88 = vector.load %arg12[%c0_37, %c0_38] : memref<1x32xf32, #tpu.memory_space<vmem>>, vector<1x32xf32>
    %c0_39 = arith.constant 0 : index
    %c0_40 = arith.constant 0 : index
    %89 = vector.load %arg13[%c0_39, %c0_40] : memref<1x32xf32, #tpu.memory_space<vmem>>, vector<1x32xf32>
    %c0_41 = arith.constant 0 : index
    %c0_42 = arith.constant 0 : index
    %90 = vector.load %arg14[%c0_41, %c0_42] : memref<32x32xf32, #tpu.memory_space<vmem>>, vector<32x32xf32>
    %c0_43 = arith.constant 0 : index
    %c0_44 = arith.constant 0 : index
    %91 = vector.load %arg15[%c0_43, %c0_44] : memref<1x32xf32, #tpu.memory_space<vmem>>, vector<1x32xf32>
    %c0_45 = arith.constant 0 : index
    %c0_46 = arith.constant 0 : index
    %92 = vector.load %arg16[%c0_45, %c0_46] : memref<1x32xf32, #tpu.memory_space<vmem>>, vector<1x32xf32>
    %c0_47 = arith.constant 0 : index
    %c0_48 = arith.constant 0 : index
    %93 = vector.load %arg17[%c0_47, %c0_48] : memref<1x32xf32, #tpu.memory_space<vmem>>, vector<1x32xf32>
    %c0_49 = arith.constant 0 : index
    %c0_50 = arith.constant 0 : index
    %94 = vector.load %arg18[%c0_49, %c0_50] : memref<32x6xf32, #tpu.memory_space<vmem>>, vector<32x6xf32>
    %c0_51 = arith.constant 0 : index
    %c0_52 = arith.constant 0 : index
    %95 = vector.load %arg19[%c0_51, %c0_52] : memref<1x6xf32, #tpu.memory_space<vmem>>, vector<1x6xf32>
    %cst_53 = arith.constant dense<0.000000e+00> : vector<16x32xf32>
    %96 = tpu.matmul %16, %87, %cst_53 {dimension_numbers = #tpu.dot_dimension_numbers<[1], [0], [0], [1], [0, 0, 1, 1], [], []>} : vector<16x32xf32>, vector<32x32xf32>, vector<16x32xf32> -> vector<16x32xf32>
    %97 = vector.broadcast %77 : vector<16x1xf32> to vector<16x32xf32>
    %98 = vector.broadcast %89 : vector<1x32xf32> to vector<16x32xf32>
    %99 = arith.mulf %97, %98 : vector<16x32xf32>
    %100 = arith.addf %96, %99 : vector<16x32xf32>
    %101 = vector.broadcast %88 : vector<1x32xf32> to vector<16x32xf32>
    %102 = arith.mulf %16, %101 : vector<16x32xf32>
    %cst_54 = arith.constant dense<0.000000e+00> : vector<16xf32>
    %103 = vector.multi_reduction <add>, %102, %cst_54 [1] : vector<16x32xf32> to vector<16xf32>
    %104 = vector.shape_cast %103 : vector<16xf32> to vector<16x1xf32>
    %105 = vector.broadcast %24 : f32 to vector<16x1xf32>
    %106 = arith.mulf %77, %105 : vector<16x1xf32>
    %107 = arith.addf %104, %106 : vector<16x1xf32>
    %cst_55 = arith.constant 0.000000e+00 : f32
    %108 = vector.broadcast %cst_55 : f32 to vector<16x32xf32>
    %109 = arith.cmpf oge, %100, %108 : vector<16x32xf32>
    %110 = vector.broadcast %22 : f32 to vector<16x32xf32>
    %111 = arith.mulf %110, %100 : vector<16x32xf32>
    %112 = arith.select %109, %100, %111 : vector<16x32xi1>, vector<16x32xf32>
    %113 = math.tanh %112 : vector<16x32xf32>
    %cst_56 = arith.constant 0.000000e+00 : f32
    %114 = vector.broadcast %cst_56 : f32 to vector<16x1xf32>
    %115 = arith.cmpf oge, %107, %114 : vector<16x1xf32>
    %116 = vector.broadcast %22 : f32 to vector<16x1xf32>
    %117 = arith.mulf %116, %107 : vector<16x1xf32>
    %118 = arith.select %115, %107, %117 : vector<16x1xi1>, vector<16x1xf32>
    %119 = math.tanh %118 : vector<16x1xf32>
    %120 = arith.mulf %16, %113 : vector<16x32xf32>
    %121 = arith.mulf %77, %119 : vector<16x1xf32>
    %cst_57 = arith.constant dense<0.000000e+00> : vector<16xf32>
    %122 = vector.multi_reduction <add>, %120, %cst_57 [1] : vector<16x32xf32> to vector<16xf32>
    %123 = vector.shape_cast %122 : vector<16xf32> to vector<16x1xf32>
    %124 = arith.addf %123, %121 : vector<16x1xf32>
    %cst_58 = arith.constant 0.0303030312 : f32
    %125 = vector.broadcast %cst_58 : f32 to vector<16x1xf32>
    %126 = arith.mulf %124, %125 : vector<16x1xf32>
    %127 = vector.broadcast %126 : vector<16x1xf32> to vector<16x32xf32>
    %128 = arith.subf %120, %127 : vector<16x32xf32>
    %129 = arith.mulf %128, %128 : vector<16x32xf32>
    %cst_59 = arith.constant dense<0.000000e+00> : vector<16xf32>
    %130 = vector.multi_reduction <add>, %129, %cst_59 [1] : vector<16x32xf32> to vector<16xf32>
    %131 = vector.shape_cast %130 : vector<16xf32> to vector<16x1xf32>
    %132 = arith.subf %121, %126 : vector<16x1xf32>
    %133 = arith.mulf %132, %132 : vector<16x1xf32>
    %134 = arith.addf %131, %133 : vector<16x1xf32>
    %cst_60 = arith.constant 0.0303030312 : f32
    %135 = vector.broadcast %cst_60 : f32 to vector<16x1xf32>
    %136 = arith.mulf %134, %135 : vector<16x1xf32>
    %cst_61 = arith.constant 9.99999974E-6 : f32
    %137 = vector.broadcast %cst_61 : f32 to vector<16x1xf32>
    %138 = arith.addf %136, %137 : vector<16x1xf32>
    %139 = math.rsqrt %138 : vector<16x1xf32>
    %140 = vector.broadcast %126 : vector<16x1xf32> to vector<16x32xf32>
    %141 = arith.subf %120, %140 : vector<16x32xf32>
    %142 = vector.broadcast %139 : vector<16x1xf32> to vector<16x32xf32>
    %143 = arith.mulf %141, %142 : vector<16x32xf32>
    %144 = arith.subf %121, %126 : vector<16x1xf32>
    %145 = arith.mulf %144, %139 : vector<16x1xf32>
    %cst_62 = arith.constant dense<0.000000e+00> : vector<16x32xf32>
    %146 = tpu.matmul %143, %90, %cst_62 {dimension_numbers = #tpu.dot_dimension_numbers<[1], [0], [0], [1], [0, 0, 1, 1], [], []>} : vector<16x32xf32>, vector<32x32xf32>, vector<16x32xf32> -> vector<16x32xf32>
    %147 = vector.broadcast %145 : vector<16x1xf32> to vector<16x32xf32>
    %148 = vector.broadcast %92 : vector<1x32xf32> to vector<16x32xf32>
    %149 = arith.mulf %147, %148 : vector<16x32xf32>
    %150 = arith.addf %146, %149 : vector<16x32xf32>
    %151 = vector.broadcast %93 : vector<1x32xf32> to vector<16x32xf32>
    %152 = arith.addf %150, %151 : vector<16x32xf32>
    %153 = vector.broadcast %91 : vector<1x32xf32> to vector<16x32xf32>
    %154 = arith.mulf %143, %153 : vector<16x32xf32>
    %cst_63 = arith.constant dense<0.000000e+00> : vector<16xf32>
    %155 = vector.multi_reduction <add>, %154, %cst_63 [1] : vector<16x32xf32> to vector<16xf32>
    %156 = vector.shape_cast %155 : vector<16xf32> to vector<16x1xf32>
    %157 = vector.broadcast %25 : f32 to vector<16x1xf32>
    %158 = arith.mulf %145, %157 : vector<16x1xf32>
    %159 = arith.addf %156, %158 : vector<16x1xf32>
    %160 = vector.broadcast %26 : f32 to vector<16x1xf32>
    %161 = arith.addf %159, %160 : vector<16x1xf32>
    %cst_64 = arith.constant 0.000000e+00 : f32
    %162 = vector.broadcast %cst_64 : f32 to vector<16x32xf32>
    %163 = arith.cmpf oge, %152, %162 : vector<16x32xf32>
    %164 = vector.broadcast %23 : f32 to vector<16x32xf32>
    %165 = arith.mulf %164, %152 : vector<16x32xf32>
    %166 = arith.select %163, %152, %165 : vector<16x32xi1>, vector<16x32xf32>
    %cst_65 = arith.constant 0.000000e+00 : f32
    %167 = vector.broadcast %cst_65 : f32 to vector<16x1xf32>
    %168 = arith.cmpf oge, %161, %167 : vector<16x1xf32>
    %169 = vector.broadcast %23 : f32 to vector<16x1xf32>
    %170 = arith.mulf %169, %161 : vector<16x1xf32>
    %171 = arith.select %168, %161, %170 : vector<16x1xi1>, vector<16x1xf32>
    %cst_66 = arith.constant dense<0.000000e+00> : vector<16x6xf32>
    %172 = tpu.matmul %166, %94, %cst_66 {dimension_numbers = #tpu.dot_dimension_numbers<[1], [0], [0], [1], [0, 0, 1, 1], [], []>} : vector<16x32xf32>, vector<32x6xf32>, vector<16x6xf32> -> vector<16x6xf32>
    %173 = arith.addf %86, %172 : vector<16x6xf32>
    %174 = vector.broadcast %171 : vector<16x1xf32> to vector<16x6xf32>
    %175 = vector.broadcast %95 : vector<1x6xf32> to vector<16x6xf32>
    %176 = arith.mulf %174, %175 : vector<16x6xf32>
    %177 = arith.addf %173, %176 : vector<16x6xf32>
    %c9 = arith.constant 9 : index
    %178 = memref.load %arg1[%c9] : memref<17xf32, #tpu.memory_space<smem>>
    %c10 = arith.constant 10 : index
    %179 = memref.load %arg1[%c10] : memref<17xf32, #tpu.memory_space<smem>>
    %c11 = arith.constant 11 : index
    %180 = memref.load %arg1[%c11] : memref<17xf32, #tpu.memory_space<smem>>
    %c12 = arith.constant 12 : index
    %181 = memref.load %arg1[%c12] : memref<17xf32, #tpu.memory_space<smem>>
    %c13 = arith.constant 13 : index
    %182 = memref.load %arg1[%c13] : memref<17xf32, #tpu.memory_space<smem>>
    %c14 = arith.constant 14 : index
    %183 = memref.load %arg1[%c14] : memref<17xf32, #tpu.memory_space<smem>>
    %c15 = arith.constant 15 : index
    %184 = memref.load %arg1[%c15] : memref<17xf32, #tpu.memory_space<smem>>
    %c16 = arith.constant 16 : index
    %185 = memref.load %arg1[%c16] : memref<17xf32, #tpu.memory_space<smem>>
    %c0_67 = arith.constant 0 : index
    %c0_68 = arith.constant 0 : index
    %186 = vector.load %arg20[%c0_67, %c0_68] : memref<32x32xf32, #tpu.memory_space<vmem>>, vector<32x32xf32>
    %c0_69 = arith.constant 0 : index
    %c0_70 = arith.constant 0 : index
    %187 = vector.load %arg21[%c0_69, %c0_70] : memref<32x32xf32, #tpu.memory_space<vmem>>, vector<32x32xf32>
    %c0_71 = arith.constant 0 : index
    %c0_72 = arith.constant 0 : index
    %188 = vector.load %arg22[%c0_71, %c0_72] : memref<1x32xf32, #tpu.memory_space<vmem>>, vector<1x32xf32>
    %c0_73 = arith.constant 0 : index
    %c0_74 = arith.constant 0 : index
    %189 = vector.load %arg23[%c0_73, %c0_74] : memref<1x32xf32, #tpu.memory_space<vmem>>, vector<1x32xf32>
    %cst_75 = arith.constant dense<0.000000e+00> : vector<16x32xf32>
    %190 = tpu.matmul %16, %186, %cst_75 {dimension_numbers = #tpu.dot_dimension_numbers<[1], [0], [0], [1], [0, 0, 1, 1], [], []>} : vector<16x32xf32>, vector<32x32xf32>, vector<16x32xf32> -> vector<16x32xf32>
    %cst_76 = arith.constant 0.000000e+00 : f32
    %191 = vector.broadcast %cst_76 : f32 to vector<16x32xf32>
    %192 = arith.cmpf oge, %190, %191 : vector<16x32xf32>
    %193 = vector.broadcast %178 : f32 to vector<16x32xf32>
    %194 = arith.mulf %193, %190 : vector<16x32xf32>
    %195 = arith.select %192, %190, %194 : vector<16x32xi1>, vector<16x32xf32>
    %196 = math.tanh %195 : vector<16x32xf32>
    %197 = arith.mulf %16, %196 : vector<16x32xf32>
    %cst_77 = arith.constant dense<0.000000e+00> : vector<16xf32>
    %198 = vector.multi_reduction <add>, %197, %cst_77 [1] : vector<16x32xf32> to vector<16xf32>
    %199 = vector.shape_cast %198 : vector<16xf32> to vector<16x1xf32>
    %cst_78 = arith.constant 3.200000e+01 : f32
    %200 = vector.broadcast %cst_78 : f32 to vector<16x1xf32>
    %201 = arith.divf %199, %200 : vector<16x1xf32>
    %202 = vector.broadcast %201 : vector<16x1xf32> to vector<16x32xf32>
    %203 = arith.subf %197, %202 : vector<16x32xf32>
    %204 = arith.mulf %203, %203 : vector<16x32xf32>
    %cst_79 = arith.constant dense<0.000000e+00> : vector<16xf32>
    %205 = vector.multi_reduction <add>, %204, %cst_79 [1] : vector<16x32xf32> to vector<16xf32>
    %206 = vector.shape_cast %205 : vector<16xf32> to vector<16x1xf32>
    %cst_80 = arith.constant 3.200000e+01 : f32
    %207 = vector.broadcast %cst_80 : f32 to vector<16x1xf32>
    %208 = arith.divf %206, %207 : vector<16x1xf32>
    %209 = vector.broadcast %201 : vector<16x1xf32> to vector<16x32xf32>
    %210 = arith.subf %197, %209 : vector<16x32xf32>
    %cst_81 = arith.constant 9.99999974E-6 : f32
    %211 = vector.broadcast %cst_81 : f32 to vector<16x1xf32>
    %212 = arith.addf %208, %211 : vector<16x1xf32>
    %213 = math.rsqrt %212 : vector<16x1xf32>
    %214 = vector.broadcast %213 : vector<16x1xf32> to vector<16x32xf32>
    %215 = arith.mulf %210, %214 : vector<16x32xf32>
    %cst_82 = arith.constant dense<0.000000e+00> : vector<16x32xf32>
    %216 = tpu.matmul %215, %187, %cst_82 {dimension_numbers = #tpu.dot_dimension_numbers<[1], [0], [0], [1], [0, 0, 1, 1], [], []>} : vector<16x32xf32>, vector<32x32xf32>, vector<16x32xf32> -> vector<16x32xf32>
    %217 = vector.broadcast %188 : vector<1x32xf32> to vector<16x32xf32>
    %218 = arith.addf %216, %217 : vector<16x32xf32>
    %cst_83 = arith.constant 0.000000e+00 : f32
    %219 = vector.broadcast %cst_83 : f32 to vector<16x32xf32>
    %220 = arith.cmpf oge, %218, %219 : vector<16x32xf32>
    %221 = vector.broadcast %179 : f32 to vector<16x32xf32>
    %222 = arith.mulf %221, %218 : vector<16x32xf32>
    %223 = arith.select %220, %218, %222 : vector<16x32xi1>, vector<16x32xf32>
    %224 = vector.broadcast %189 : vector<1x32xf32> to vector<16x32xf32>
    %225 = arith.mulf %223, %224 : vector<16x32xf32>
    %cst_84 = arith.constant dense<0.000000e+00> : vector<16xf32>
    %226 = vector.multi_reduction <add>, %225, %cst_84 [1] : vector<16x32xf32> to vector<16xf32>
    %227 = vector.shape_cast %226 : vector<16xf32> to vector<16x1xf32>
    %228 = vector.broadcast %180 : f32 to vector<16x1xf32>
    %229 = arith.addf %227, %228 : vector<16x1xf32>
    %cst_85 = arith.constant 0.000000e+00 : f32
    %230 = vector.broadcast %cst_85 : f32 to vector<16x1xf32>
    %231 = arith.subf %230, %229 : vector<16x1xf32>
    %232 = math.exp %231 : vector<16x1xf32>
    %cst_86 = arith.constant 1.000000e+00 : f32
    %233 = vector.broadcast %cst_86 : f32 to vector<16x1xf32>
    %234 = arith.addf %233, %232 : vector<16x1xf32>
    %cst_87 = arith.constant 1.000000e+00 : f32
    %235 = vector.broadcast %cst_87 : f32 to vector<16x1xf32>
    %236 = arith.divf %235, %234 : vector<16x1xf32>
    %c3_i32 = arith.constant 3 : i32
    %237 = vector.broadcast %c3_i32 : i32 to vector<1x6xi32>
    %238 = arith.cmpi eq, %17, %237 : vector<1x6xi32>
    %cst_88 = arith.constant 0.000000e+00 : f32
    %239 = vector.shape_cast %238 : vector<1x6xi1> to vector<1x6xi1>
    %240 = vector.broadcast %239 : vector<1x6xi1> to vector<16x6xi1>
    %241 = vector.shape_cast %229 : vector<16x1xf32> to vector<16x1xf32>
    %242 = vector.broadcast %241 : vector<16x1xf32> to vector<16x6xf32>
    %243 = vector.broadcast %cst_88 : f32 to vector<16x6xf32>
    %244 = arith.select %240, %242, %243 : vector<16x6xi1>, vector<16x6xf32>
    %245 = arith.addf %177, %244 : vector<16x6xf32>
    %c0_89 = arith.constant 0 : index
    %c0_90 = arith.constant 0 : index
    %246 = vector.load %arg24[%c0_89, %c0_90] : memref<32x32xf32, #tpu.memory_space<vmem>>, vector<32x32xf32>
    %c0_91 = arith.constant 0 : index
    %c0_92 = arith.constant 0 : index
    %247 = vector.load %arg25[%c0_91, %c0_92] : memref<1x32xf32, #tpu.memory_space<vmem>>, vector<1x32xf32>
    %c0_93 = arith.constant 0 : index
    %c0_94 = arith.constant 0 : index
    %248 = vector.load %arg26[%c0_93, %c0_94] : memref<1x32xf32, #tpu.memory_space<vmem>>, vector<1x32xf32>
    %c0_95 = arith.constant 0 : index
    %c0_96 = arith.constant 0 : index
    %249 = vector.load %arg27[%c0_95, %c0_96] : memref<32x32xf32, #tpu.memory_space<vmem>>, vector<32x32xf32>
    %c0_97 = arith.constant 0 : index
    %c0_98 = arith.constant 0 : index
    %250 = vector.load %arg28[%c0_97, %c0_98] : memref<1x32xf32, #tpu.memory_space<vmem>>, vector<1x32xf32>
    %c0_99 = arith.constant 0 : index
    %c0_100 = arith.constant 0 : index
    %251 = vector.load %arg29[%c0_99, %c0_100] : memref<1x32xf32, #tpu.memory_space<vmem>>, vector<1x32xf32>
    %c0_101 = arith.constant 0 : index
    %c0_102 = arith.constant 0 : index
    %252 = vector.load %arg30[%c0_101, %c0_102] : memref<1x32xf32, #tpu.memory_space<vmem>>, vector<1x32xf32>
    %c0_103 = arith.constant 0 : index
    %c0_104 = arith.constant 0 : index
    %253 = vector.load %arg31[%c0_103, %c0_104] : memref<32x6xf32, #tpu.memory_space<vmem>>, vector<32x6xf32>
    %c0_105 = arith.constant 0 : index
    %c0_106 = arith.constant 0 : index
    %254 = vector.load %arg32[%c0_105, %c0_106] : memref<1x6xf32, #tpu.memory_space<vmem>>, vector<1x6xf32>
    %cst_107 = arith.constant dense<0.000000e+00> : vector<16x32xf32>
    %255 = tpu.matmul %16, %246, %cst_107 {dimension_numbers = #tpu.dot_dimension_numbers<[1], [0], [0], [1], [0, 0, 1, 1], [], []>} : vector<16x32xf32>, vector<32x32xf32>, vector<16x32xf32> -> vector<16x32xf32>
    %256 = vector.broadcast %236 : vector<16x1xf32> to vector<16x32xf32>
    %257 = vector.broadcast %248 : vector<1x32xf32> to vector<16x32xf32>
    %258 = arith.mulf %256, %257 : vector<16x32xf32>
    %259 = arith.addf %255, %258 : vector<16x32xf32>
    %260 = vector.broadcast %247 : vector<1x32xf32> to vector<16x32xf32>
    %261 = arith.mulf %16, %260 : vector<16x32xf32>
    %cst_108 = arith.constant dense<0.000000e+00> : vector<16xf32>
    %262 = vector.multi_reduction <add>, %261, %cst_108 [1] : vector<16x32xf32> to vector<16xf32>
    %263 = vector.shape_cast %262 : vector<16xf32> to vector<16x1xf32>
    %264 = vector.broadcast %183 : f32 to vector<16x1xf32>
    %265 = arith.mulf %236, %264 : vector<16x1xf32>
    %266 = arith.addf %263, %265 : vector<16x1xf32>
    %cst_109 = arith.constant 0.000000e+00 : f32
    %267 = vector.broadcast %cst_109 : f32 to vector<16x32xf32>
    %268 = arith.cmpf oge, %259, %267 : vector<16x32xf32>
    %269 = vector.broadcast %181 : f32 to vector<16x32xf32>
    %270 = arith.mulf %269, %259 : vector<16x32xf32>
    %271 = arith.select %268, %259, %270 : vector<16x32xi1>, vector<16x32xf32>
    %272 = math.tanh %271 : vector<16x32xf32>
    %cst_110 = arith.constant 0.000000e+00 : f32
    %273 = vector.broadcast %cst_110 : f32 to vector<16x1xf32>
    %274 = arith.cmpf oge, %266, %273 : vector<16x1xf32>
    %275 = vector.broadcast %181 : f32 to vector<16x1xf32>
    %276 = arith.mulf %275, %266 : vector<16x1xf32>
    %277 = arith.select %274, %266, %276 : vector<16x1xi1>, vector<16x1xf32>
    %278 = math.tanh %277 : vector<16x1xf32>
    %279 = arith.mulf %16, %272 : vector<16x32xf32>
    %280 = arith.mulf %236, %278 : vector<16x1xf32>
    %cst_111 = arith.constant dense<0.000000e+00> : vector<16xf32>
    %281 = vector.multi_reduction <add>, %279, %cst_111 [1] : vector<16x32xf32> to vector<16xf32>
    %282 = vector.shape_cast %281 : vector<16xf32> to vector<16x1xf32>
    %283 = arith.addf %282, %280 : vector<16x1xf32>
    %cst_112 = arith.constant 0.0303030312 : f32
    %284 = vector.broadcast %cst_112 : f32 to vector<16x1xf32>
    %285 = arith.mulf %283, %284 : vector<16x1xf32>
    %286 = vector.broadcast %285 : vector<16x1xf32> to vector<16x32xf32>
    %287 = arith.subf %279, %286 : vector<16x32xf32>
    %288 = arith.mulf %287, %287 : vector<16x32xf32>
    %cst_113 = arith.constant dense<0.000000e+00> : vector<16xf32>
    %289 = vector.multi_reduction <add>, %288, %cst_113 [1] : vector<16x32xf32> to vector<16xf32>
    %290 = vector.shape_cast %289 : vector<16xf32> to vector<16x1xf32>
    %291 = arith.subf %280, %285 : vector<16x1xf32>
    %292 = arith.mulf %291, %291 : vector<16x1xf32>
    %293 = arith.addf %290, %292 : vector<16x1xf32>
    %cst_114 = arith.constant 0.0303030312 : f32
    %294 = vector.broadcast %cst_114 : f32 to vector<16x1xf32>
    %295 = arith.mulf %293, %294 : vector<16x1xf32>
    %cst_115 = arith.constant 9.99999974E-6 : f32
    %296 = vector.broadcast %cst_115 : f32 to vector<16x1xf32>
    %297 = arith.addf %295, %296 : vector<16x1xf32>
    %298 = math.rsqrt %297 : vector<16x1xf32>
    %299 = vector.broadcast %285 : vector<16x1xf32> to vector<16x32xf32>
    %300 = arith.subf %279, %299 : vector<16x32xf32>
    %301 = vector.broadcast %298 : vector<16x1xf32> to vector<16x32xf32>
    %302 = arith.mulf %300, %301 : vector<16x32xf32>
    %303 = arith.subf %280, %285 : vector<16x1xf32>
    %304 = arith.mulf %303, %298 : vector<16x1xf32>
    %cst_116 = arith.constant dense<0.000000e+00> : vector<16x32xf32>
    %305 = tpu.matmul %302, %249, %cst_116 {dimension_numbers = #tpu.dot_dimension_numbers<[1], [0], [0], [1], [0, 0, 1, 1], [], []>} : vector<16x32xf32>, vector<32x32xf32>, vector<16x32xf32> -> vector<16x32xf32>
    %306 = vector.broadcast %304 : vector<16x1xf32> to vector<16x32xf32>
    %307 = vector.broadcast %251 : vector<1x32xf32> to vector<16x32xf32>
    %308 = arith.mulf %306, %307 : vector<16x32xf32>
    %309 = arith.addf %305, %308 : vector<16x32xf32>
    %310 = vector.broadcast %252 : vector<1x32xf32> to vector<16x32xf32>
    %311 = arith.addf %309, %310 : vector<16x32xf32>
    %312 = vector.broadcast %250 : vector<1x32xf32> to vector<16x32xf32>
    %313 = arith.mulf %302, %312 : vector<16x32xf32>
    %cst_117 = arith.constant dense<0.000000e+00> : vector<16xf32>
    %314 = vector.multi_reduction <add>, %313, %cst_117 [1] : vector<16x32xf32> to vector<16xf32>
    %315 = vector.shape_cast %314 : vector<16xf32> to vector<16x1xf32>
    %316 = vector.broadcast %184 : f32 to vector<16x1xf32>
    %317 = arith.mulf %304, %316 : vector<16x1xf32>
    %318 = arith.addf %315, %317 : vector<16x1xf32>
    %319 = vector.broadcast %185 : f32 to vector<16x1xf32>
    %320 = arith.addf %318, %319 : vector<16x1xf32>
    %cst_118 = arith.constant 0.000000e+00 : f32
    %321 = vector.broadcast %cst_118 : f32 to vector<16x32xf32>
    %322 = arith.cmpf oge, %311, %321 : vector<16x32xf32>
    %323 = vector.broadcast %182 : f32 to vector<16x32xf32>
    %324 = arith.mulf %323, %311 : vector<16x32xf32>
    %325 = arith.select %322, %311, %324 : vector<16x32xi1>, vector<16x32xf32>
    %cst_119 = arith.constant 0.000000e+00 : f32
    %326 = vector.broadcast %cst_119 : f32 to vector<16x1xf32>
    %327 = arith.cmpf oge, %320, %326 : vector<16x1xf32>
    %328 = vector.broadcast %182 : f32 to vector<16x1xf32>
    %329 = arith.mulf %328, %320 : vector<16x1xf32>
    %330 = arith.select %327, %320, %329 : vector<16x1xi1>, vector<16x1xf32>
    %cst_120 = arith.constant dense<0.000000e+00> : vector<16x6xf32>
    %331 = tpu.matmul %325, %253, %cst_120 {dimension_numbers = #tpu.dot_dimension_numbers<[1], [0], [0], [1], [0, 0, 1, 1], [], []>} : vector<16x32xf32>, vector<32x6xf32>, vector<16x6xf32> -> vector<16x6xf32>
    %332 = arith.addf %245, %331 : vector<16x6xf32>
    %333 = vector.broadcast %330 : vector<16x1xf32> to vector<16x6xf32>
    %334 = vector.broadcast %254 : vector<1x6xf32> to vector<16x6xf32>
    %335 = arith.mulf %333, %334 : vector<16x6xf32>
    %336 = arith.addf %332, %335 : vector<16x6xf32>
    %c0_121 = arith.constant 0 : index
    %c0_122 = arith.constant 0 : index
    %337 = vector.load %arg33[%c0_121, %c0_122] : memref<1x6xf32, #tpu.memory_space<vmem>>, vector<1x6xf32>
    %338 = vector.broadcast %337 : vector<1x6xf32> to vector<16x6xf32>
    %339 = arith.addf %336, %338 : vector<16x6xf32>
    %c0_123 = arith.constant 0 : index
    %c0_124 = arith.constant 0 : index
    %340 = vector.load %arg34[%c0_123, %c0_124] : memref<16x6xf32, #tpu.memory_space<vmem>>, vector<16x6xf32>
    tpu.vector_store %arg34[%c0_123, %c0_124], %339 {strides = array<i32>} : memref<16x6xf32, #tpu.memory_space<vmem>>, vector<16x6xf32>,
    return
  }
  func.func @transform_0(%arg0: i32) -> i32 {
    %c0_i32 = arith.constant 0 : i32
    %c0_i32_0 = arith.constant 0 : i32
    return %c0_i32 : i32
  }
  func.func @transform_1(%arg0: i32) -> (i32, i32) {
    %c0_i32 = arith.constant 0 : i32
    %c0_i32_0 = arith.constant 0 : i32
    return %arg0, %c0_i32 : i32, i32
  }
  func.func @transform_2(%arg0: i32) -> (i32, i32) {
    %c0_i32 = arith.constant 0 : i32
    %c0_i32_0 = arith.constant 0 : i32
    %c0_i32_1 = arith.constant 0 : i32
    return %c0_i32, %c0_i32_0 : i32, i32
  }
  func.func @transform_3(%arg0: i32) -> (i32, i32) {
    %c0_i32 = arith.constant 0 : i32
    %c0_i32_0 = arith.constant 0 : i32
    %c0_i32_1 = arith.constant 0 : i32
    return %c0_i32, %c0_i32_0 : i32, i32
  }
  func.func @transform_4(%arg0: i32) -> (i32, i32) {
    %c0_i32 = arith.constant 0 : i32
    %c0_i32_0 = arith.constant 0 : i32
    %c0_i32_1 = arith.constant 0 : i32
    return %c0_i32, %c0_i32_0 : i32, i32
  }
  func.func @transform_5(%arg0: i32) -> (i32, i32) {
    %c0_i32 = arith.constant 0 : i32
    %c0_i32_0 = arith.constant 0 : i32
    %c0_i32_1 = arith.constant 0 : i32
    return %c0_i32, %c0_i32_0 : i32, i32
  }
  func.func @transform_6(%arg0: i32) -> (i32, i32) {
    %c0_i32 = arith.constant 0 : i32
    %c0_i32_0 = arith.constant 0 : i32
    %c0_i32_1 = arith.constant 0 : i32
    return %c0_i32, %c0_i32_0 : i32, i32
  }
  func.func @transform_7(%arg0: i32) -> (i32, i32) {
    %c0_i32 = arith.constant 0 : i32
    %c0_i32_0 = arith.constant 0 : i32
    %c0_i32_1 = arith.constant 0 : i32
    return %c0_i32, %c0_i32_0 : i32, i32
  }
  func.func @transform_8(%arg0: i32) -> (i32, i32) {
    %c0_i32 = arith.constant 0 : i32
    %c0_i32_0 = arith.constant 0 : i32
    %c0_i32_1 = arith.constant 0 : i32
    return %c0_i32, %c0_i32_0 : i32, i32
  }
  func.func @transform_9(%arg0: i32) -> (i32, i32) {
    %c0_i32 = arith.constant 0 : i32
    %c0_i32_0 = arith.constant 0 : i32
    %c0_i32_1 = arith.constant 0 : i32
    return %c0_i32, %c0_i32_0 : i32, i32
  }
  func.func @transform_10(%arg0: i32) -> (i32, i32) {
    %c0_i32 = arith.constant 0 : i32
    %c0_i32_0 = arith.constant 0 : i32
    %c0_i32_1 = arith.constant 0 : i32
    return %c0_i32, %c0_i32_0 : i32, i32
  }
  func.func @transform_11(%arg0: i32) -> (i32, i32) {
    %c0_i32 = arith.constant 0 : i32
    %c0_i32_0 = arith.constant 0 : i32
    %c0_i32_1 = arith.constant 0 : i32
    return %c0_i32, %c0_i32_0 : i32, i32
  }
  func.func @transform_12(%arg0: i32) -> (i32, i32) {
    %c0_i32 = arith.constant 0 : i32
    %c0_i32_0 = arith.constant 0 : i32
    %c0_i32_1 = arith.constant 0 : i32
    return %c0_i32, %c0_i32_0 : i32, i32
  }
  func.func @transform_13(%arg0: i32) -> (i32, i32) {
    %c0_i32 = arith.constant 0 : i32
    %c0_i32_0 = arith.constant 0 : i32
    %c0_i32_1 = arith.constant 0 : i32
    return %c0_i32, %c0_i32_0 : i32, i32
  }
  func.func @transform_14(%arg0: i32) -> (i32, i32) {
    %c0_i32 = arith.constant 0 : i32
    %c0_i32_0 = arith.constant 0 : i32
    %c0_i32_1 = arith.constant 0 : i32
    return %c0_i32, %c0_i32_0 : i32, i32
  }
  func.func @transform_15(%arg0: i32) -> (i32, i32) {
    %c0_i32 = arith.constant 0 : i32
    %c0_i32_0 = arith.constant 0 : i32
    %c0_i32_1 = arith.constant 0 : i32
    return %c0_i32, %c0_i32_0 : i32, i32
  }
  func.func @transform_16(%arg0: i32) -> (i32, i32) {
    %c0_i32 = arith.constant 0 : i32
    %c0_i32_0 = arith.constant 0 : i32
    %c0_i32_1 = arith.constant 0 : i32
    return %c0_i32, %c0_i32_0 : i32, i32
  }
  func.func @transform_17(%arg0: i32) -> (i32, i32) {
    %c0_i32 = arith.constant 0 : i32
    %c0_i32_0 = arith.constant 0 : i32
    %c0_i32_1 = arith.constant 0 : i32
    return %c0_i32, %c0_i32_0 : i32, i32
  }
  func.func @transform_18(%arg0: i32) -> (i32, i32) {
    %c0_i32 = arith.constant 0 : i32
    %c0_i32_0 = arith.constant 0 : i32
    %c0_i32_1 = arith.constant 0 : i32
    return %c0_i32, %c0_i32_0 : i32, i32
  }
  func.func @transform_19(%arg0: i32) -> (i32, i32) {
    %c0_i32 = arith.constant 0 : i32
    %c0_i32_0 = arith.constant 0 : i32
    %c0_i32_1 = arith.constant 0 : i32
    return %c0_i32, %c0_i32_0 : i32, i32
  }
  func.func @transform_20(%arg0: i32) -> (i32, i32) {
    %c0_i32 = arith.constant 0 : i32
    %c0_i32_0 = arith.constant 0 : i32
    %c0_i32_1 = arith.constant 0 : i32
    return %c0_i32, %c0_i32_0 : i32, i32
  }
  func.func @transform_21(%arg0: i32) -> (i32, i32) {
    %c0_i32 = arith.constant 0 : i32
    %c0_i32_0 = arith.constant 0 : i32
    %c0_i32_1 = arith.constant 0 : i32
    return %c0_i32, %c0_i32_0 : i32, i32
  }
  func.func @transform_22(%arg0: i32) -> (i32, i32) {
    %c0_i32 = arith.constant 0 : i32
    %c0_i32_0 = arith.constant 0 : i32
    %c0_i32_1 = arith.constant 0 : i32
    return %c0_i32, %c0_i32_0 : i32, i32
  }
  func.func @transform_23(%arg0: i32) -> (i32, i32) {
    %c0_i32 = arith.constant 0 : i32
    %c0_i32_0 = arith.constant 0 : i32
    %c0_i32_1 = arith.constant 0 : i32
    return %c0_i32, %c0_i32_0 : i32, i32
  }
  func.func @transform_24(%arg0: i32) -> (i32, i32) {
    %c0_i32 = arith.constant 0 : i32
    %c0_i32_0 = arith.constant 0 : i32
    %c0_i32_1 = arith.constant 0 : i32
    return %c0_i32, %c0_i32_0 : i32, i32
  }
  func.func @transform_25(%arg0: i32) -> (i32, i32) {
    %c0_i32 = arith.constant 0 : i32
    %c0_i32_0 = arith.constant 0 : i32
    %c0_i32_1 = arith.constant 0 : i32
    return %c0_i32, %c0_i32_0 : i32, i32
  }
  func.func @transform_26(%arg0: i32) -> (i32, i32) {
    %c0_i32 = arith.constant 0 : i32
    %c0_i32_0 = arith.constant 0 : i32
    %c0_i32_1 = arith.constant 0 : i32
    return %c0_i32, %c0_i32_0 : i32, i32
  }
  func.func @transform_27(%arg0: i32) -> (i32, i32) {
    %c0_i32 = arith.constant 0 : i32
    %c0_i32_0 = arith.constant 0 : i32
    %c0_i32_1 = arith.constant 0 : i32
    return %c0_i32, %c0_i32_0 : i32, i32
  }
  func.func @transform_28(%arg0: i32) -> (i32, i32) {
    %c0_i32 = arith.constant 0 : i32
    %c0_i32_0 = arith.constant 0 : i32
    %c0_i32_1 = arith.constant 0 : i32
    return %c0_i32, %c0_i32_0 : i32, i32
  }
  func.func @transform_29(%arg0: i32) -> (i32, i32) {
    %c0_i32 = arith.constant 0 : i32
    %c0_i32_0 = arith.constant 0 : i32
    %c0_i32_1 = arith.constant 0 : i32
    return %c0_i32, %c0_i32_0 : i32, i32
  }
  func.func @transform_30(%arg0: i32) -> (i32, i32) {
    %c0_i32 = arith.constant 0 : i32
    %c0_i32_0 = arith.constant 0 : i32
    %c0_i32_1 = arith.constant 0 : i32
    return %c0_i32, %c0_i32_0 : i32, i32
  }
  func.func @transform_31(%arg0: i32) -> (i32, i32) {
    %c0_i32 = arith.constant 0 : i32
    %c0_i32_0 = arith.constant 0 : i32
    %c0_i32_1 = arith.constant 0 : i32
    return %c0_i32, %c0_i32_0 : i32, i32
  }
  func.func @transform_32(%arg0: i32) -> (i32, i32) {
    %c0_i32 = arith.constant 0 : i32
    %c0_i32_0 = arith.constant 0 : i32
    %c0_i32_1 = arith.constant 0 : i32
    return %c0_i32, %c0_i32_0 : i32, i32
  }
  func.func @transform_33(%arg0: i32) -> (i32, i32) {
    %c0_i32 = arith.constant 0 : i32
    %c0_i32_0 = arith.constant 0 : i32
    return %arg0, %c0_i32 : i32, i32
  }
}

</mosaic_0001>

<llo_original>
// kernel: som_predictor_v2_forward.1
$region0: #{som_predictor_v2_forward.1}
  #allocation0 [shape = 'u32[]', space=smem, size = 0x4, offset = 0x4, fixed_abs, tag = 'smem constant byte address 0x4 - core index']
  #allocation1 [shape = 'u32[72,128]{1,0:T(1,128)}', space=vmem, size = 0x9000, scoped, tag = 'internal scratch']
  %s0 = inlined_call_operand.smem [shape: u32[34], index: -1, kind: input, shape index: {}]
  %s1 = sld [smem:[%s0]]
  %s2 = scalar_lea.smem %s0, 1
  %s3 = sld [smem:[%s2]]
  %s4 = scalar_lea.smem %s0, 2
  %s5 = sld [smem:[%s4]]
  %s6 = scalar_lea.smem %s0, 3
  %s7 = sld [smem:[%s6]]
  %s8 = scalar_lea.smem %s0, 4
  %s9 = sld [smem:[%s8]]
  %s10 = scalar_lea.smem %s0, 5
  %s11 = sld [smem:[%s10]]
  %s12 = scalar_lea.smem %s0, 6
  %s13 = sld [smem:[%s12]]
  %s14 = scalar_lea.smem %s0, 7
  %s15 = sld [smem:[%s14]]
  %s16 = scalar_lea.smem %s0, 8
  %s17 = sld [smem:[%s16]]
  %s18 = scalar_lea.smem %s0, 9
  %s19 = sld [smem:[%s18]]
  %s20 = scalar_lea.smem %s0, 10
  %s21 = sld [smem:[%s20]]
  %s22 = scalar_lea.smem %s0, 11
  %s23 = sld [smem:[%s22]]
  %s24 = scalar_lea.smem %s0, 12
  %s25 = sld [smem:[%s24]]
  %s26 = scalar_lea.smem %s0, 13
  %s27 = sld [smem:[%s26]]
  %s28 = scalar_lea.smem %s0, 14
  %s29 = sld [smem:[%s28]]
  %s30 = scalar_lea.smem %s0, 15
  %s31 = sld [smem:[%s30]]
  %s32 = scalar_lea.smem %s0, 16
  %s33 = sld [smem:[%s32]]
  %s34 = scalar_lea.smem %s0, 17
  %s35 = sld [smem:[%s34]]
  %s36 = scalar_lea.smem %s0, 18
  %s37 = sld [smem:[%s36]]
  %s38 = scalar_lea.smem %s0, 19
  %s39 = sld [smem:[%s38]]
  %s40 = scalar_lea.smem %s0, 20
  %s41 = sld [smem:[%s40]]
  %s42 = scalar_lea.smem %s0, 21
  %s43 = sld [smem:[%s42]]
  %s44 = scalar_lea.smem %s0, 22
  %s45 = sld [smem:[%s44]]
  %s46 = scalar_lea.smem %s0, 23
  %s47 = sld [smem:[%s46]]
  %s48 = scalar_lea.smem %s0, 24
  %s49 = sld [smem:[%s48]]
  %s50 = scalar_lea.smem %s0, 25
  %s51 = sld [smem:[%s50]]
  %s52 = scalar_lea.smem %s0, 26
  %s53 = sld [smem:[%s52]]
  %s54 = scalar_lea.smem %s0, 27
  %s55 = sld [smem:[%s54]]
  %s56 = scalar_lea.smem %s0, 28
  %s57 = sld [smem:[%s56]]
  %s58 = scalar_lea.smem %s0, 29
  %s59 = sld [smem:[%s58]]
  %s60 = scalar_lea.smem %s0, 30
  %s61 = sld [smem:[%s60]]
  %s62 = scalar_lea.smem %s0, 31
  %s63 = sld [smem:[%s62]]
  %s64 = scalar_lea.smem %s0, 32
  %s65 = sld [smem:[%s64]]
  %s66 = scalar_lea.smem %s0, 33
  %s67 = sld [smem:[%s66]]
  %s68 = sld [smem:[#allocation0]]
  $region182: #{som_predictor_v2_forward.1} parent=0
    _
  %s70 = ssub.s32 1, %s68
  %s71 = scalar_select 0, %s70, %s68
  $region1: #{som_predictor_v2_forward.1} parent=0
    #allocation2 [shape = 'u8[512]{0}', space=smem, size = 0x200, scoped, tag = 'input window, operand 0, single buffered']
    #allocation3 [shape = 's32[1]{0}', space=sflag, size = 0x4, scoped, tag = 'scoped memory for som_predictor_v2_forward.1']
    #allocation4 [shape = 's32[1]{0}', space=sflag, size = 0x4, scoped, tag = 'scoped memory for som_predictor_v2_forward.1']
    #allocation5 [shape = 'u8[8192]{0}', space=vmem, size = 0x2000, scoped, tag = 'input window, operand 1, single buffered']
    #allocation6 [shape = 'u8[16384]{0}', space=vmem, size = 0x4000, scoped, tag = 'input window, operand 6, single buffered']
    #allocation7 [shape = 's32[1]{0}', space=sflag, size = 0x4, scoped, tag = 'scoped memory for som_predictor_v2_forward.1']
    #allocation8 [shape = 'u8[16384]{0}', space=vmem, size = 0x4000, scoped, tag = 'input window, operand 7, single buffered']
    #allocation9 [shape = 'u8[16384]{0}', space=vmem, size = 0x4000, scoped, tag = 'input window, operand 10, single buffered']
    #allocation10 [shape = 's32[1]{0}', space=sflag, size = 0x4, scoped, tag = 'scoped memory for som_predictor_v2_forward.1']
    #allocation11 [shape = 'u8[16384]{0}', space=vmem, size = 0x4000, scoped, tag = 'input window, operand 13, single buffered']
    #allocation12 [shape = 'u8[16384]{0}', space=vmem, size = 0x4000, scoped, tag = 'input window, operand 19, single buffered']
    #allocation13 [shape = 's32[1]{0}', space=sflag, size = 0x4, scoped, tag = 'scoped memory for som_predictor_v2_forward.1']
    #allocation14 [shape = 'u8[16384]{0}', space=vmem, size = 0x4000, scoped, tag = 'input window, operand 20, single buffered']
    #allocation15 [shape = 'u8[16384]{0}', space=vmem, size = 0x4000, scoped, tag = 'input window, operand 23, single buffered']
    #allocation16 [shape = 's32[1]{0}', space=sflag, size = 0x4, scoped, tag = 'scoped memory for som_predictor_v2_forward.1']
    #allocation17 [shape = 'u8[16384]{0}', space=vmem, size = 0x4000, scoped, tag = 'input window, operand 26, single buffered']
    %72 = vsyncpa [#allocation4], 0
    %73 = vsyncpa [#allocation3], 0
    %74 = vsyncpa [#allocation7], 0
    %75 = vsyncpa [#allocation10], 0
    %76 = vsyncpa [#allocation13], 0
    %77 = vsyncpa [#allocation16], 0
    // Predicated region
    $region2: #{som_predictor_v2_forward.1} parent=1 // pred_check
      _
    $region3: #{som_predictor_v2_forward.1} parent=1 // pred_check_branch
      %79 = sbr.rel (0) target = $region5
    $region4: #{som_predictor_v2_forward.1} parent=1 // pred_region
      %81 = vsyncadd [#allocation4], 0
      %s83 = sshll.u32 %s1, 4
      %s84 = int_to_ptr.vmem [resolvable:$true] %s83
      %86 = dma.vmem_to_smem %s84, 16, [#allocation2], [#allocation4]
    $region5: #{som_predictor_v2_forward.1} parent=1 // pred_fallthru
      _
    // Predicated region
    $region6: #{som_predictor_v2_forward.1} parent=1 // pred_check
      _
    $region7: #{som_predictor_v2_forward.1} parent=1 // pred_check_branch
      %88 = sbr.rel (0) target = $region9
    $region8: #{som_predictor_v2_forward.1} parent=1 // pred_region
      %90 = vsyncadd [#allocation3], 0
      %s91 = sshll.u32 %s3, 4
      %s92 = int_to_ptr.hbm [resolvable:$true] %s91
      %s93 = sshll.u32 [#allocation5], 4
      %s94 = int_to_ptr.vmem [resolvable:$true] %s93
      %99 = dma.hbm_to_vmem [thread:$0]  %s92, 256, %s94, [#allocation3], 128, 128, 8
    $region9: #{som_predictor_v2_forward.1} parent=1 // pred_fallthru
      _
    // Predicated region
    $region10: #{som_predictor_v2_forward.1} parent=1 // pred_check
      _
    $region11: #{som_predictor_v2_forward.1} parent=1 // pred_check_branch
      %101 = sbr.rel (0) target = $region13
    $region12: #{som_predictor_v2_forward.1} parent=1 // pred_region
      _
    $region13: #{som_predictor_v2_forward.1} parent=1 // pred_fallthru
      _
    // Predicated region
    $region14: #{som_predictor_v2_forward.1} parent=1 // pred_check
      _
    $region15: #{som_predictor_v2_forward.1} parent=1 // pred_check_branch
      %103 = sbr.rel (0) target = $region17
    $region16: #{som_predictor_v2_forward.1} parent=1 // pred_region
      _
    $region17: #{som_predictor_v2_forward.1} parent=1 // pred_fallthru
      _
    // Predicated region
    $region18: #{som_predictor_v2_forward.1} parent=1 // pred_check
      _
    $region19: #{som_predictor_v2_forward.1} parent=1 // pred_check_branch
      %105 = sbr.rel (0) target = $region21
    $region20: #{som_predictor_v2_forward.1} parent=1 // pred_region
      _
    $region21: #{som_predictor_v2_forward.1} parent=1 // pred_fallthru
      _
    // Predicated region
    $region22: #{som_predictor_v2_forward.1} parent=1 // pred_check
      _
    $region23: #{som_predictor_v2_forward.1} parent=1 // pred_check_branch
      %107 = sbr.rel (0) target = $region25
    $region24: #{som_predictor_v2_forward.1} parent=1 // pred_region
      _
    $region25: #{som_predictor_v2_forward.1} parent=1 // pred_fallthru
      _
    // Predicated region
    $region26: #{som_predictor_v2_forward.1} parent=1 // pred_check
      _
    $region27: #{som_predictor_v2_forward.1} parent=1 // pred_check_branch
      %109 = sbr.rel (0) target = $region29
    $region28: #{som_predictor_v2_forward.1} parent=1 // pred_region
      %111 = vsyncadd [#allocation7], 0
      %s112 = sshll.u32 %s13, 4
      %s113 = int_to_ptr.hbm [resolvable:$true] %s112
      %s114 = sshll.u32 [#allocation6], 4
      %s115 = int_to_ptr.vmem [resolvable:$true] %s114
      %120 = dma.hbm_to_vmem [thread:$0]  %s113, 512, %s115, [#allocation7], 128, 128, 8
    $region29: #{som_predictor_v2_forward.1} parent=1 // pred_fallthru
      _
    // Predicated region
    $region30: #{som_predictor_v2_forward.1} parent=1 // pred_check
      _
    $region31: #{som_predictor_v2_forward.1} parent=1 // pred_check_branch
      %122 = sbr.rel (0) target = $region33
    $region32: #{som_predictor_v2_forward.1} parent=1 // pred_region
      %124 = vsyncadd [#allocation7], 0
      %s125 = sshll.u32 %s15, 4
      %s126 = int_to_ptr.hbm [resolvable:$true] %s125
      %s127 = sshll.u32 [#allocation8], 4
      %s128 = int_to_ptr.vmem [resolvable:$true] %s127
      %133 = dma.hbm_to_vmem [thread:$0]  %s126, 512, %s128, [#allocation7], 128, 128, 8
    $region33: #{som_predictor_v2_forward.1} parent=1 // pred_fallthru
      _
    // Predicated region
    $region34: #{som_predictor_v2_forward.1} parent=1 // pred_check
      _
    $region35: #{som_predictor_v2_forward.1} parent=1 // pred_check_branch
      %135 = sbr.rel (0) target = $region37
    $region36: #{som_predictor_v2_forward.1} parent=1 // pred_region
      _
    $region37: #{som_predictor_v2_forward.1} parent=1 // pred_fallthru
      _
    // Predicated region
    $region38: #{som_predictor_v2_forward.1} parent=1 // pred_check
      _
    $region39: #{som_predictor_v2_forward.1} parent=1 // pred_check_branch
      %137 = sbr.rel (0) target = $region41
    $region40: #{som_predictor_v2_forward.1} parent=1 // pred_region
      _
    $region41: #{som_predictor_v2_forward.1} parent=1 // pred_fallthru
      _
    // Predicated region
    $region42: #{som_predictor_v2_forward.1} parent=1 // pred_check
      _
    $region43: #{som_predictor_v2_forward.1} parent=1 // pred_check_branch
      %139 = sbr.rel (0) target = $region45
    $region44: #{som_predictor_v2_forward.1} parent=1 // pred_region
      %141 = vsyncadd [#allocation10], 0
      %s142 = sshll.u32 %s21, 4
      %s143 = int_to_ptr.hbm [resolvable:$true] %s142
      %s144 = sshll.u32 [#allocation9], 4
      %s145 = int_to_ptr.vmem [resolvable:$true] %s144
      %150 = dma.hbm_to_vmem [thread:$0]  %s143, 512, %s145, [#allocation10], 128, 128, 8
    $region45: #{som_predictor_v2_forward.1} parent=1 // pred_fallthru
      _
    // Predicated region
    $region46: #{som_predictor_v2_forward.1} parent=1 // pred_check
      _
    $region47: #{som_predictor_v2_forward.1} parent=1 // pred_check_branch
      %152 = sbr.rel (0) target = $region49
    $region48: #{som_predictor_v2_forward.1} parent=1 // pred_region
      _
    $region49: #{som_predictor_v2_forward.1} parent=1 // pred_fallthru
      _
    // Predicated region
    $region50: #{som_predictor_v2_forward.1} parent=1 // pred_check
      _
    $region51: #{som_predictor_v2_forward.1} parent=1 // pred_check_branch
      %154 = sbr.rel (0) target = $region53
    $region52: #{som_predictor_v2_forward.1} parent=1 // pred_region
      _
    $region53: #{som_predictor_v2_forward.1} parent=1 // pred_fallthru
      _
    // Predicated region
    $region54: #{som_predictor_v2_forward.1} parent=1 // pred_check
      _
    $region55: #{som_predictor_v2_forward.1} parent=1 // pred_check_branch
      %156 = sbr.rel (0) target = $region57
    $region56: #{som_predictor_v2_forward.1} parent=1 // pred_region
      %158 = vsyncadd [#allocation10], 0
      %s159 = sshll.u32 %s27, 4
      %s160 = int_to_ptr.hbm [resolvable:$true] %s159
      %s161 = sshll.u32 [#allocation11], 4
      %s162 = int_to_ptr.vmem [resolvable:$true] %s161
      %167 = dma.hbm_to_vmem [thread:$0]  %s160, 512, %s162, [#allocation10], 128, 128, 8
    $region57: #{som_predictor_v2_forward.1} parent=1 // pred_fallthru
      _
    // Predicated region
    $region58: #{som_predictor_v2_forward.1} parent=1 // pred_check
      _
    $region59: #{som_predictor_v2_forward.1} parent=1 // pred_check_branch
      %169 = sbr.rel (0) target = $region61
    $region60: #{som_predictor_v2_forward.1} parent=1 // pred_region
      _
    $region61: #{som_predictor_v2_forward.1} parent=1 // pred_fallthru
      _
    // Predicated region
    $region62: #{som_predictor_v2_forward.1} parent=1 // pred_check
      _
    $region63: #{som_predictor_v2_forward.1} parent=1 // pred_check_branch
      %171 = sbr.rel (0) target = $region65
    $region64: #{som_predictor_v2_forward.1} parent=1 // pred_region
      _
    $region65: #{som_predictor_v2_forward.1} parent=1 // pred_fallthru
      _
    // Predicated region
    $region66: #{som_predictor_v2_forward.1} parent=1 // pred_check
      _
    $region67: #{som_predictor_v2_forward.1} parent=1 // pred_check_branch
      %173 = sbr.rel (0) target = $region69
    $region68: #{som_predictor_v2_forward.1} parent=1 // pred_region
      _
    $region69: #{som_predictor_v2_forward.1} parent=1 // pred_fallthru
      _
    // Predicated region
    $region70: #{som_predictor_v2_forward.1} parent=1 // pred_check
      _
    $region71: #{som_predictor_v2_forward.1} parent=1 // pred_check_branch
      %175 = sbr.rel (0) target = $region73
    $region72: #{som_predictor_v2_forward.1} parent=1 // pred_region
      _
    $region73: #{som_predictor_v2_forward.1} parent=1 // pred_fallthru
      _
    // Predicated region
    $region74: #{som_predictor_v2_forward.1} parent=1 // pred_check
      _
    $region75: #{som_predictor_v2_forward.1} parent=1 // pred_check_branch
      %177 = sbr.rel (0) target = $region77
    $region76: #{som_predictor_v2_forward.1} parent=1 // pred_region
      _
    $region77: #{som_predictor_v2_forward.1} parent=1 // pred_fallthru
      _
    // Predicated region
    $region78: #{som_predictor_v2_forward.1} parent=1 // pred_check
      _
    $region79: #{som_predictor_v2_forward.1} parent=1 // pred_check_branch
      %179 = sbr.rel (0) target = $region81
    $region80: #{som_predictor_v2_forward.1} parent=1 // pred_region
      %181 = vsyncadd [#allocation13], 0
      %s182 = sshll.u32 %s39, 4
      %s183 = int_to_ptr.hbm [resolvable:$true] %s182
      %s184 = sshll.u32 [#allocation12], 4
      %s185 = int_to_ptr.vmem [resolvable:$true] %s184
      %190 = dma.hbm_to_vmem [thread:$0]  %s183, 512, %s185, [#allocation13], 128, 128, 8
    $region81: #{som_predictor_v2_forward.1} parent=1 // pred_fallthru
      _
    // Predicated region
    $region82: #{som_predictor_v2_forward.1} parent=1 // pred_check
      _
    $region83: #{som_predictor_v2_forward.1} parent=1 // pred_check_branch
      %192 = sbr.rel (0) target = $region85
    $region84: #{som_predictor_v2_forward.1} parent=1 // pred_region
      %194 = vsyncadd [#allocation13], 0
      %s195 = sshll.u32 %s41, 4
      %s196 = int_to_ptr.hbm [resolvable:$true] %s195
      %s197 = sshll.u32 [#allocation14], 4
      %s198 = int_to_ptr.vmem [resolvable:$true] %s197
      %203 = dma.hbm_to_vmem [thread:$0]  %s196, 512, %s198, [#allocation13], 128, 128, 8
    $region85: #{som_predictor_v2_forward.1} parent=1 // pred_fallthru
      _
    // Predicated region
    $region86: #{som_predictor_v2_forward.1} parent=1 // pred_check
      _
    $region87: #{som_predictor_v2_forward.1} parent=1 // pred_check_branch
      %205 = sbr.rel (0) target = $region89
    $region88: #{som_predictor_v2_forward.1} parent=1 // pred_region
      _
    $region89: #{som_predictor_v2_forward.1} parent=1 // pred_fallthru
      _
    // Predicated region
    $region90: #{som_predictor_v2_forward.1} parent=1 // pred_check
      _
    $region91: #{som_predictor_v2_forward.1} parent=1 // pred_check_branch
      %207 = sbr.rel (0) target = $region93
    $region92: #{som_predictor_v2_forward.1} parent=1 // pred_region
      _
    $region93: #{som_predictor_v2_forward.1} parent=1 // pred_fallthru
      _
    // Predicated region
    $region94: #{som_predictor_v2_forward.1} parent=1 // pred_check
      _
    $region95: #{som_predictor_v2_forward.1} parent=1 // pred_check_branch
      %209 = sbr.rel (0) target = $region97
    $region96: #{som_predictor_v2_forward.1} parent=1 // pred_region
      %211 = vsyncadd [#allocation16], 0
      %s212 = sshll.u32 %s47, 4
      %s213 = int_to_ptr.hbm [resolvable:$true] %s212
      %s214 = sshll.u32 [#allocation15], 4
      %s215 = int_to_ptr.vmem [resolvable:$true] %s214
      %220 = dma.hbm_to_vmem [thread:$0]  %s213, 512, %s215, [#allocation16], 128, 128, 8
    $region97: #{som_predictor_v2_forward.1} parent=1 // pred_fallthru
      _
    // Predicated region
    $region98: #{som_predictor_v2_forward.1} parent=1 // pred_check
      _
    $region99: #{som_predictor_v2_forward.1} parent=1 // pred_check_branch
      %222 = sbr.rel (0) target = $region101
    $region100: #{som_predictor_v2_forward.1} parent=1 // pred_region
      _
    $region101: #{som_predictor_v2_forward.1} parent=1 // pred_fallthru
      _
    // Predicated region
    $region102: #{som_predictor_v2_forward.1} parent=1 // pred_check
      _
    $region103: #{som_predictor_v2_forward.1} parent=1 // pred_check_branch
      %224 = sbr.rel (0) target = $region105
    $region104: #{som_predictor_v2_forward.1} parent=1 // pred_region
      _
    $region105: #{som_predictor_v2_forward.1} parent=1 // pred_fallthru
      _
    // Predicated region
    $region106: #{som_predictor_v2_forward.1} parent=1 // pred_check
      _
    $region107: #{som_predictor_v2_forward.1} parent=1 // pred_check_branch
      %226 = sbr.rel (0) target = $region109
    $region108: #{som_predictor_v2_forward.1} parent=1 // pred_region
      %228 = vsyncadd [#allocation16], 0
      %s229 = sshll.u32 %s53, 4
      %s230 = int_to_ptr.hbm [resolvable:$true] %s229
      %s231 = sshll.u32 [#allocation17], 4
      %s232 = int_to_ptr.vmem [resolvable:$true] %s231
      %237 = dma.hbm_to_vmem [thread:$0]  %s230, 512, %s232, [#allocation16], 128, 128, 8
    $region109: #{som_predictor_v2_forward.1} parent=1 // pred_fallthru
      _
    // Predicated region
    $region110: #{som_predictor_v2_forward.1} parent=1 // pred_check
      _
    $region111: #{som_predictor_v2_forward.1} parent=1 // pred_check_branch
      %239 = sbr.rel (0) target = $region113
    $region112: #{som_predictor_v2_forward.1} parent=1 // pred_region
      _
    $region113: #{som_predictor_v2_forward.1} parent=1 // pred_fallthru
      _
    // Predicated region
    $region114: #{som_predictor_v2_forward.1} parent=1 // pred_check
      _
    $region115: #{som_predictor_v2_forward.1} parent=1 // pred_check_branch
      %241 = sbr.rel (0) target = $region117
    $region116: #{som_predictor_v2_forward.1} parent=1 // pred_region
      _
    $region117: #{som_predictor_v2_forward.1} parent=1 // pred_fallthru
      _
    // Predicated region
    $region118: #{som_predictor_v2_forward.1} parent=1 // pred_check
      _
    $region119: #{som_predictor_v2_forward.1} parent=1 // pred_check_branch
      %243 = sbr.rel (0) target = $region121
    $region120: #{som_predictor_v2_forward.1} parent=1 // pred_region
      _
    $region121: #{som_predictor_v2_forward.1} parent=1 // pred_fallthru
      _
    // Predicated region
    $region122: #{som_predictor_v2_forward.1} parent=1 // pred_check
      _
    $region123: #{som_predictor_v2_forward.1} parent=1 // pred_check_branch
      %245 = sbr.rel (0) target = $region125
    $region124: #{som_predictor_v2_forward.1} parent=1 // pred_region
      _
    $region125: #{som_predictor_v2_forward.1} parent=1 // pred_fallthru
      _
    // Predicated region
    $region126: #{som_predictor_v2_forward.1} parent=1 // pred_check
      _
    $region127: #{som_predictor_v2_forward.1} parent=1 // pred_check_branch
      %247 = sbr.rel (0) target = $region129
    $region128: #{som_predictor_v2_forward.1} parent=1 // pred_region
      _
    $region129: #{som_predictor_v2_forward.1} parent=1 // pred_fallthru
      _
    // Predicated region
    $region130: #{som_predictor_v2_forward.1} parent=1 // pred_check
      _
    $region131: #{som_predictor_v2_forward.1} parent=1 // pred_check_branch
      %249 = sbr.rel (0) target = $region133
    $region132: #{som_predictor_v2_forward.1} parent=1 // pred_region
      _
    $region133: #{som_predictor_v2_forward.1} parent=1 // pred_fallthru
      _
    // Predicated region
    $region134: #{som_predictor_v2_forward.1} parent=1 // pred_check
      _
    $region135: #{som_predictor_v2_forward.1} parent=1 // pred_check_branch
      %251 = sbr.rel (0) target = $region137
    $region136: #{som_predictor_v2_forward.1} parent=1 // pred_region
      %253 = dma.done [#allocation4], 16
    $region137: #{som_predictor_v2_forward.1} parent=1 // pred_fallthru
      _
    // Predicated region
    $region138: #{som_predictor_v2_forward.1} parent=1 // pred_check
      _
    $region139: #{som_predictor_v2_forward.1} parent=1 // pred_check_branch
      %255 = sbr.rel (0) target = $region141
    $region140: #{som_predictor_v2_forward.1} parent=1 // pred_region
      %257 = dma.done [#allocation3], 256
    $region141: #{som_predictor_v2_forward.1} parent=1 // pred_fallthru
      _
    // Predicated region
    $region142: #{som_predictor_v2_forward.1} parent=1 // pred_check
      _
    $region143: #{som_predictor_v2_forward.1} parent=1 // pred_check_branch
      %259 = sbr.rel (0) target = $region145
    $region144: #{som_predictor_v2_forward.1} parent=1 // pred_region
      %261 = dma.done [#allocation7], 512
    $region145: #{som_predictor_v2_forward.1} parent=1 // pred_fallthru
      _
    // Predicated region
    $region146: #{som_predictor_v2_forward.1} parent=1 // pred_check
      _
    $region147: #{som_predictor_v2_forward.1} parent=1 // pred_check_branch
      %263 = sbr.rel (0) target = $region149
    $region148: #{som_predictor_v2_forward.1} parent=1 // pred_region
      %265 = dma.done [#allocation7], 512
    $region149: #{som_predictor_v2_forward.1} parent=1 // pred_fallthru
      _
    // Predicated region
    $region150: #{som_predictor_v2_forward.1} parent=1 // pred_check
      _
    $region151: #{som_predictor_v2_forward.1} parent=1 // pred_check_branch
      %267 = sbr.rel (0) target = $region153
    $region152: #{som_predictor_v2_forward.1} parent=1 // pred_region
      %269 = dma.done [#allocation10], 512
    $region153: #{som_predictor_v2_forward.1} parent=1 // pred_fallthru
      _
    // Predicated region
    $region154: #{som_predictor_v2_forward.1} parent=1 // pred_check
      _
    $region155: #{som_predictor_v2_forward.1} parent=1 // pred_check_branch
      %271 = sbr.rel (0) target = $region157
    $region156: #{som_predictor_v2_forward.1} parent=1 // pred_region
      %273 = dma.done [#allocation10], 512
    $region157: #{som_predictor_v2_forward.1} parent=1 // pred_fallthru
      _
    // Predicated region
    $region158: #{som_predictor_v2_forward.1} parent=1 // pred_check
      _
    $region159: #{som_predictor_v2_forward.1} parent=1 // pred_check_branch
      %275 = sbr.rel (0) target = $region161
    $region160: #{som_predictor_v2_forward.1} parent=1 // pred_region
      %277 = dma.done [#allocation13], 512
    $region161: #{som_predictor_v2_forward.1} parent=1 // pred_fallthru
      _
    // Predicated region
    $region162: #{som_predictor_v2_forward.1} parent=1 // pred_check
      _
    $region163: #{som_predictor_v2_forward.1} parent=1 // pred_check_branch
      %279 = sbr.rel (0) target = $region165
    $region164: #{som_predictor_v2_forward.1} parent=1 // pred_region
      %281 = dma.done [#allocation13], 512
    $region165: #{som_predictor_v2_forward.1} parent=1 // pred_fallthru
      _
    // Predicated region
    $region166: #{som_predictor_v2_forward.1} parent=1 // pred_check
      _
    $region167: #{som_predictor_v2_forward.1} parent=1 // pred_check_branch
      %283 = sbr.rel (0) target = $region169
    $region168: #{som_predictor_v2_forward.1} parent=1 // pred_region
      %285 = dma.done [#allocation16], 512
    $region169: #{som_predictor_v2_forward.1} parent=1 // pred_fallthru
      _
    // Predicated region
    $region170: #{som_predictor_v2_forward.1} parent=1 // pred_check
      _
    $region171: #{som_predictor_v2_forward.1} parent=1 // pred_check_branch
      %287 = sbr.rel (0) target = $region173
    $region172: #{som_predictor_v2_forward.1} parent=1 // pred_region
      %289 = dma.done [#allocation16], 512
    $region173: #{som_predictor_v2_forward.1} parent=1 // pred_fallthru
      _
    %290 = sfence
    %s291 = sld [smem:[#allocation2]]
    %v292 = vld [vmem:[#allocation5] sm:$0xff]
    %v293 = vld [vmem:[#allocation5 + $0x8] sm:$0xff]
    %v294 = vld [vmem:[%s5] sm:$0xff]
    %v295 = vld [vmem:[%s5 + $0x8] sm:$0xff]
    %v296 = vld [vmem:[%s5 + $0x10] sm:$0xff]
    %v297 = vld [vmem:[%s5 + $0x18] sm:$0xff]
    %v298 = vld [vmem:[%s7] sm:$0x1]
    %v299 = vld [vmem:[%s9] sm:$0xff]
    %v300 = vld [vmem:[%s9 + $0x8] sm:$0xff]
    %v301 = vld [vmem:[%s9 + $0x10] sm:$0xff]
    %v302 = vld [vmem:[%s9 + $0x18] sm:$0xff]
    %v303 = vld [vmem:[%s11] sm:$0x1]
    %v305 = vperm.slane %v298, 0
    %vm307 = vcmask 261120
    %v309 = vsel %vm307, %v292, 0
    %v312 = vsel %vm307, %v293, 0
    %314 = vmatpush.msra.mxu0 0.0
    %315 = vmatpush.msra.mxu0 0.0
    %316 = vmatpush.msra.mxu0 0.0
    %317 = vmatpush.msra.mxu0 0.0
    %318 = vmatpush.msra.mxu0 0.0
    %319 = vmatpush.msra.mxu0 0.0
    %320 = vmatpush.msra.mxu0 0.0
    %321 = vmatpush.msra.mxu0 0.0
    %322 = vmatpush.msra.mxu0 0.0
    %323 = vmatpush.msra.mxu0 0.0
    %324 = vmatpush.msra.mxu0 0.0
    %325 = vmatpush.msra.mxu0 0.0
    %326 = vmatpush.msra.mxu0 %v297
    %327 = vmatpush.msra.mxu0 %v296
    %328 = vmatpush.msra.mxu0 %v295
    %329 = vmatpush.msra.mxu0 %v294
    %330 = vmatmul.f32.gmra.mxu0 %v309
    %v331 = vpop.f32.mrf.mxu0
    %v332 = vadd.f32 %v305, %v331
    %333 = vmatmul.f32.gmra.mxu0 %v312
    %v334 = vpop.f32.mrf.mxu0
    %v335 = vadd.f32 %v305, %v334
    %336 = vdwg.mxu0
    %vm337 = vcmp.ge.f32.partialorder %v332, 0.0
    %vm338 = vcmp.ge.f32.partialorder %v335, 0.0
    %v339 = vstv %s291
    %v340 = vmul.f32 %v339, %v332
    %v341 = vmul.f32 %v339, %v335
    %v342 = vsel %vm337, %v332, %v340
    %v343 = vsel %vm338, %v335, %v341
    %v345 = vperm.slane %v303, 0
    %v348 = vsel %vm307, %v342, 0
    %v351 = vsel %vm307, %v343, 0
    %353 = vmatpush.msra.mxu0 0.0
    %354 = vmatpush.msra.mxu0 0.0
    %355 = vmatpush.msra.mxu0 0.0
    %356 = vmatpush.msra.mxu0 0.0
    %357 = vmatpush.msra.mxu0 0.0
    %358 = vmatpush.msra.mxu0 0.0
    %359 = vmatpush.msra.mxu0 0.0
    %360 = vmatpush.msra.mxu0 0.0
    %361 = vmatpush.msra.mxu0 0.0
    %362 = vmatpush.msra.mxu0 0.0
    %363 = vmatpush.msra.mxu0 0.0
    %364 = vmatpush.msra.mxu0 0.0
    %365 = vmatpush.msra.mxu0 %v302
    %366 = vmatpush.msra.mxu0 %v301
    %367 = vmatpush.msra.mxu0 %v300
    %368 = vmatpush.msra.mxu0 %v299
    %369 = vmatmul.f32.gmra.mxu0 %v348
    %v370 = vpop.f32.mrf.mxu0
    %v371 = vadd.f32 %v345, %v370
    %372 = vmatmul.f32.gmra.mxu0 %v351
    %v373 = vpop.f32.mrf.mxu0
    %v374 = vadd.f32 %v345, %v373
    %375 = vdwg.mxu0
    %v376 = vlaneseq
    %v377 = vand.u32 %v376, 127
    %s378 = sld [smem:[#allocation2 + $0x1]]
    %s379 = sld [smem:[#allocation2 + $0x2]]
    %s380 = sld [smem:[#allocation2 + $0x3]]
    %s381 = sld [smem:[#allocation2 + $0x4]]
    %s382 = sld [smem:[#allocation2 + $0x5]]
    %s383 = sld [smem:[#allocation2 + $0x6]]
    %s384 = sld [smem:[#allocation2 + $0x7]]
    %s385 = sld [smem:[#allocation2 + $0x8]]
    %v386 = vld [vmem:[#allocation6] sm:$0xff]
    %v387 = vld [vmem:[#allocation6 + $0x8] sm:$0xff]
    %v388 = vld [vmem:[#allocation6 + $0x10] sm:$0xff]
    %v389 = vld [vmem:[#allocation6 + $0x18] sm:$0xff]
    %v390 = vld [vmem:[#allocation8] sm:$0xff]
    %v391 = vld [vmem:[#allocation8 + $0x8] sm:$0xff]
    %v392 = vld [vmem:[#allocation8 + $0x10] sm:$0xff]
    %v393 = vld [vmem:[#allocation8 + $0x18] sm:$0xff]
    %v394 = vld [vmem:[%s17] sm:$0x1]
    %v395 = vld [vmem:[%s19] sm:$0x1]
    %v397 = vsel %vm307, %v371, 0
    %v400 = vsel %vm307, %v374, 0
    %402 = vmatpush.msra.mxu0 0.0
    %403 = vmatpush.msra.mxu0 0.0
    %404 = vmatpush.msra.mxu0 0.0
    %405 = vmatpush.msra.mxu0 0.0
    %406 = vmatpush.msra.mxu0 0.0
    %407 = vmatpush.msra.mxu0 0.0
    %408 = vmatpush.msra.mxu0 0.0
    %409 = vmatpush.msra.mxu0 0.0
    %410 = vmatpush.msra.mxu0 0.0
    %411 = vmatpush.msra.mxu0 0.0
    %412 = vmatpush.msra.mxu0 0.0
    %413 = vmatpush.msra.mxu0 0.0
    %414 = vmatpush.msra.mxu0 %v389
    %415 = vmatpush.msra.mxu0 %v388
    %416 = vmatpush.msra.mxu0 %v387
    %417 = vmatpush.msra.mxu0 %v386
    %418 = vmatmul.f32.gmra.mxu0 %v397
    %v419 = vpop.f32.mrf.mxu0
    %v420 = vadd.f32 0.0, %v419
    %421 = vmatmul.f32.gmra.mxu0 %v400
    %v422 = vpop.f32.mrf.mxu0
    %v423 = vadd.f32 0.0, %v422
    %424 = vdwg.mxu0
    %vm425 = vcmp.ge.f32.partialorder %v420, 0.0
    %vm426 = vcmp.ge.f32.partialorder %v423, 0.0
    %v427 = vstv %s378
    %v428 = vmul.f32 %v427, %v420
    %v429 = vmul.f32 %v427, %v423
    %v430 = vsel %vm425, %v420, %v428
    %v431 = vsel %vm426, %v423, %v429
    %v432 = vtanh.pop %v430
    %v433 = vtanh.pop %v431
    %v434 = vmul.f32 %v371, %v432
    %v435 = vmul.f32 %v374, %v433
    %v436 = vsel %vm307, %v434, 0.0
    %437 = vadd.xlane.f32.xlu0 %v436
    %v438 = vpop.xlane.xlu0 %437
    %v439 = vsel %vm307, %v435, 0.0
    %440 = vadd.xlane.f32.xlu0 %v439
    %v441 = vpop.xlane.xlu0 %440
    %v442 = vrcp.pop 32.0
    %v443 = vmul.f32 32.0, %v442
    %v444 = vsub.f32 1.0, %v443
    %v445 = vmul.f32 %v442, %v444
    %v446 = vadd.f32 %v442, %v445
    %vm447 = vweird.f32 %v442
    %v448 = vsel %vm447, %v442, %v446
    %v449 = vmul.f32 %v438, %v448
    %v450 = vmul.f32 %v441, %v448
    %v451 = vsub.f32 %v434, %v449
    %v452 = vsub.f32 %v435, %v450
    %v453 = vmul.f32 %v451, %v451
    %v454 = vmul.f32 %v452, %v452
    %v455 = vsel %vm307, %v453, 0.0
    %456 = vadd.xlane.f32.xlu0 %v455
    %v457 = vpop.xlane.xlu0 %456
    %v458 = vsel %vm307, %v454, 0.0
    %459 = vadd.xlane.f32.xlu0 %v458
    %v460 = vpop.xlane.xlu0 %459
    %v461 = vmul.f32 %v457, %v448
    %v462 = vmul.f32 %v460, %v448
    %v463 = vadd.f32 %v461, 1e-05
    %v464 = vadd.f32 %v462, 1e-05
    %v465 = vrsqrt.pop %v463
    %v466 = vmul.f32 %v465, %v463
    %v467 = vmul.f32 %v466, %v465
    %v468 = vmul.f32 0.5, %v467
    %v469 = vsub.f32 1.5, %v468
    %v470 = vmul.f32 %v465, %v469
    %vm471 = vweird.f32 %v463
    %vm472 = vweird.f32 %v465
    %vm473 = vmor %vm471, %vm472
    %v474 = vsel %vm473, %v465, %v470
    %v475 = vrsqrt.pop %v464
    %v476 = vmul.f32 %v475, %v464
    %v477 = vmul.f32 %v476, %v475
    %v478 = vmul.f32 0.5, %v477
    %v479 = vsub.f32 1.5, %v478
    %v480 = vmul.f32 %v475, %v479
    %vm481 = vweird.f32 %v464
    %vm482 = vweird.f32 %v475
    %vm483 = vmor %vm481, %vm482
    %v484 = vsel %vm483, %v475, %v480
    %v485 = vmul.f32 %v451, %v474
    %v486 = vmul.f32 %v452, %v484
    %v488 = vperm.slane %v394, 0
    %v491 = vsel %vm307, %v485, 0
    %v494 = vsel %vm307, %v486, 0
    %496 = vmatpush.msra.mxu0 0.0
    %497 = vmatpush.msra.mxu0 0.0
    %498 = vmatpush.msra.mxu0 0.0
    %499 = vmatpush.msra.mxu0 0.0
    %500 = vmatpush.msra.mxu0 0.0
    %501 = vmatpush.msra.mxu0 0.0
    %502 = vmatpush.msra.mxu0 0.0
    %503 = vmatpush.msra.mxu0 0.0
    %504 = vmatpush.msra.mxu0 0.0
    %505 = vmatpush.msra.mxu0 0.0
    %506 = vmatpush.msra.mxu0 0.0
    %507 = vmatpush.msra.mxu0 0.0
    %508 = vmatpush.msra.mxu0 %v393
    %509 = vmatpush.msra.mxu0 %v392
    %510 = vmatpush.msra.mxu0 %v391
    %511 = vmatpush.msra.mxu0 %v390
    %512 = vmatmul.f32.gmra.mxu0 %v491
    %v513 = vpop.f32.mrf.mxu0
    %v514 = vadd.f32 %v488, %v513
    %515 = vmatmul.f32.gmra.mxu0 %v494
    %v516 = vpop.f32.mrf.mxu0
    %v517 = vadd.f32 %v488, %v516
    %518 = vdwg.mxu0
    %vm519 = vcmp.ge.f32.partialorder %v514, 0.0
    %vm520 = vcmp.ge.f32.partialorder %v517, 0.0
    %v521 = vstv %s379
    %v522 = vmul.f32 %v521, %v514
    %v523 = vmul.f32 %v521, %v517
    %v524 = vsel %vm519, %v514, %v522
    %v525 = vsel %vm520, %v517, %v523
    %v527 = vperm.slane %v395, 0
    %v529 = vmul.f32 %v524, %v527
    %v530 = vmul.f32 %v525, %v527
    %v531 = vsel %vm307, %v529, 0.0
    %532 = vadd.xlane.f32.xlu0 %v531
    %v533 = vpop.xlane.xlu0 %532
    %v534 = vsel %vm307, %v530, 0.0
    %535 = vadd.xlane.f32.xlu0 %v534
    %v536 = vpop.xlane.xlu0 %535
    %v537 = vstv %s380
    %v538 = vadd.f32 %v533, %v537
    %v539 = vadd.f32 %v536, %v537
    %v540 = vsub.f32 0.0, %v538
    %v541 = vsub.f32 0.0, %v539
    %v542 = vmul.f32 %v540, 1.442695
    %v543 = vpow.pop %v542
    %v544 = vmul.f32 %v541, 1.442695
    %v545 = vpow.pop %v544
    %v546 = vadd.f32 %v543, 1.0
    %v547 = vadd.f32 %v545, 1.0
    %v548 = vrcp.pop %v546
    %v549 = vmul.f32 %v546, %v548
    %v550 = vsub.f32 1.0, %v549
    %v551 = vmul.f32 %v548, %v550
    %v552 = vadd.f32 %v548, %v551
    %vm553 = vweird.f32 %v546
    %vm554 = vweird.f32 %v548
    %vm555 = vmor %vm553, %vm554
    %v556 = vsel %vm555, %v548, %v552
    %v557 = vand.u32 2147483647, %v546
    %vm558 = vcmp.eq.f32.partialorder %v557, 8.507059e+37
    %v559 = vand.u32 %v546, 2147483648
    %v560 = vor.u32 1.1754944e-38, %v559
    %v561 = vsel %vm558, %v560, %v556
    %v562 = vmul.f32 1.0, %v561
    %v563 = vrcp.pop %v547
    %v564 = vmul.f32 %v547, %v563
    %v565 = vsub.f32 1.0, %v564
    %v566 = vmul.f32 %v563, %v565
    %v567 = vadd.f32 %v563, %v566
    %vm568 = vweird.f32 %v547
    %vm569 = vweird.f32 %v563
    %vm570 = vmor %vm568, %vm569
    %v571 = vsel %vm570, %v563, %v567
    %v572 = vand.u32 2147483647, %v547
    %vm573 = vcmp.eq.f32.partialorder %v572, 8.507059e+37
    %v574 = vand.u32 %v547, 2147483648
    %v575 = vor.u32 1.1754944e-38, %v574
    %v576 = vsel %vm573, %v575, %v571
    %v577 = vmul.f32 1.0, %v576
    %vm578 = vcmp.eq.s32.totalorder %v377, 0
    %v579 = vsel %vm578, 1, 0
    %vm580 = vcmp.eq.s32.totalorder %v579, 1
    %v581 = vsel %vm580, %v538, 0.0
    %v582 = vsel %vm580, %v539, 0.0
    %v583 = vadd.f32 %v581, 0.0
    %v584 = vadd.f32 %v582, 0.0
    %v585 = vld [vmem:[#allocation9] sm:$0xff]
    %v586 = vld [vmem:[#allocation9 + $0x8] sm:$0xff]
    %v587 = vld [vmem:[#allocation9 + $0x10] sm:$0xff]
    %v588 = vld [vmem:[#allocation9 + $0x18] sm:$0xff]
    %v589 = vld [vmem:[%s23] sm:$0x1]
    %v590 = vld [vmem:[%s25] sm:$0x1]
    %v591 = vld [vmem:[#allocation11] sm:$0xff]
    %v592 = vld [vmem:[#allocation11 + $0x8] sm:$0xff]
    %v593 = vld [vmem:[#allocation11 + $0x10] sm:$0xff]
    %v594 = vld [vmem:[#allocation11 + $0x18] sm:$0xff]
    %v595 = vld [vmem:[%s29] sm:$0x1]
    %v596 = vld [vmem:[%s31] sm:$0x1]
    %v597 = vld [vmem:[%s33] sm:$0x1]
    %v598 = vld [vmem:[%s35] sm:$0xff]
    %v599 = vld [vmem:[%s35 + $0x8] sm:$0xff]
    %v600 = vld [vmem:[%s35 + $0x10] sm:$0xff]
    %v601 = vld [vmem:[%s35 + $0x18] sm:$0xff]
    %v602 = vld [vmem:[%s37] sm:$0x1]
    %v604 = vperm.slane %v590, 0
    %v606 = vmul.f32 %v562, %v604
    %v607 = vmul.f32 %v577, %v604
    %608 = vmatpush.msra.mxu0 0.0
    %609 = vmatpush.msra.mxu0 0.0
    %610 = vmatpush.msra.mxu0 0.0
    %611 = vmatpush.msra.mxu0 0.0
    %612 = vmatpush.msra.mxu0 0.0
    %613 = vmatpush.msra.mxu0 0.0
    %614 = vmatpush.msra.mxu0 0.0
    %615 = vmatpush.msra.mxu0 0.0
    %616 = vmatpush.msra.mxu0 0.0
    %617 = vmatpush.msra.mxu0 0.0
    %618 = vmatpush.msra.mxu0 0.0
    %619 = vmatpush.msra.mxu0 0.0
    %620 = vmatpush.msra.mxu0 %v588
    %621 = vmatpush.msra.mxu0 %v587
    %622 = vmatpush.msra.mxu0 %v586
    %623 = vmatpush.msra.mxu0 %v585
    %624 = vmatmul.f32.gmra.mxu0 %v397
    %v625 = vpop.f32.mrf.mxu0
    %v626 = vadd.f32 %v606, %v625
    %627 = vmatmul.f32.gmra.mxu0 %v400
    %v628 = vpop.f32.mrf.mxu0
    %v629 = vadd.f32 %v607, %v628
    %630 = vdwg.mxu0
    %v632 = vperm.slane %v589, 0
    %v634 = vmul.f32 %v371, %v632
    %v635 = vmul.f32 %v374, %v632
    %v636 = vsel %vm307, %v634, 0.0
    %637 = vadd.xlane.f32.xlu0 %v636
    %v638 = vpop.xlane.xlu0 %637
    %v639 = vsel %vm307, %v635, 0.0
    %640 = vadd.xlane.f32.xlu0 %v639
    %v641 = vpop.xlane.xlu0 %640
    %v642 = vstv %s383
    %v643 = vmul.f32 %v562, %v642
    %v644 = vmul.f32 %v577, %v642
    %v645 = vadd.f32 %v638, %v643
    %v646 = vadd.f32 %v641, %v644
    %vm647 = vcmp.ge.f32.partialorder %v626, 0.0
    %vm648 = vcmp.ge.f32.partialorder %v629, 0.0
    %v649 = vstv %s381
    %v650 = vmul.f32 %v649, %v626
    %v651 = vmul.f32 %v649, %v629
    %v652 = vsel %vm647, %v626, %v650
    %v653 = vsel %vm648, %v629, %v651
    %v654 = vtanh.pop %v652
    %v655 = vtanh.pop %v653
    %vm656 = vcmp.ge.f32.partialorder %v645, 0.0
    %vm657 = vcmp.ge.f32.partialorder %v646, 0.0
    %v658 = vmul.f32 %v649, %v645
    %v659 = vmul.f32 %v649, %v646
    %v660 = vsel %vm656, %v645, %v658
    %v661 = vsel %vm657, %v646, %v659
    %v662 = vtanh.pop %v660
    %v663 = vtanh.pop %v661
    %v664 = vmul.f32 %v371, %v654
    %v665 = vmul.f32 %v374, %v655
    %v666 = vmul.f32 %v562, %v662
    %v667 = vmul.f32 %v577, %v663
    %v668 = vsel %vm307, %v664, 0.0
    %669 = vadd.xlane.f32.xlu0 %v668
    %v670 = vpop.xlane.xlu0 %669
    %v671 = vsel %vm307, %v665, 0.0
    %672 = vadd.xlane.f32.xlu0 %v671
    %v673 = vpop.xlane.xlu0 %672
    %v674 = vadd.f32 %v670, %v666
    %v675 = vadd.f32 %v673, %v667
    %v676 = vmul.f32 %v674, 0.030303031
    %v677 = vmul.f32 %v675, 0.030303031
    %v678 = vsub.f32 %v664, %v676
    %v679 = vsub.f32 %v665, %v677
    %v680 = vmul.f32 %v678, %v678
    %v681 = vmul.f32 %v679, %v679
    %v682 = vsel %vm307, %v680, 0.0
    %683 = vadd.xlane.f32.xlu0 %v682
    %v684 = vpop.xlane.xlu0 %683
    %v685 = vsel %vm307, %v681, 0.0
    %686 = vadd.xlane.f32.xlu0 %v685
    %v687 = vpop.xlane.xlu0 %686
    %v688 = vsub.f32 %v666, %v676
    %v689 = vsub.f32 %v667, %v677
    %v690 = vmul.f32 %v688, %v688
    %v691 = vmul.f32 %v689, %v689
    %v692 = vadd.f32 %v684, %v690
    %v693 = vadd.f32 %v687, %v691
    %v694 = vmul.f32 %v692, 0.030303031
    %v695 = vmul.f32 %v693, 0.030303031
    %v696 = vadd.f32 %v694, 1e-05
    %v697 = vadd.f32 %v695, 1e-05
    %v698 = vrsqrt.pop %v696
    %v699 = vmul.f32 %v698, %v696
    %v700 = vmul.f32 %v699, %v698
    %v701 = vmul.f32 0.5, %v700
    %v702 = vsub.f32 1.5, %v701
    %v703 = vmul.f32 %v698, %v702
    %vm704 = vweird.f32 %v696
    %vm705 = vweird.f32 %v698
    %vm706 = vmor %vm704, %vm705
    %v707 = vsel %vm706, %v698, %v703
    %v708 = vrsqrt.pop %v697
    %v709 = vmul.f32 %v708, %v697
    %v710 = vmul.f32 %v709, %v708
    %v711 = vmul.f32 0.5, %v710
    %v712 = vsub.f32 1.5, %v711
    %v713 = vmul.f32 %v708, %v712
    %vm714 = vweird.f32 %v697
    %vm715 = vweird.f32 %v708
    %vm716 = vmor %vm714, %vm715
    %v717 = vsel %vm716, %v708, %v713
    %v718 = vmul.f32 %v678, %v707
    %v719 = vmul.f32 %v679, %v717
    %v720 = vmul.f32 %v688, %v707
    %v721 = vmul.f32 %v689, %v717
    %v723 = vperm.slane %v596, 0
    %v725 = vmul.f32 %v720, %v723
    %v726 = vmul.f32 %v721, %v723
    %v728 = vsel %vm307, %v718, 0
    %v731 = vsel %vm307, %v719, 0
    %733 = vmatpush.msra.mxu0 0.0
    %734 = vmatpush.msra.mxu0 0.0
    %735 = vmatpush.msra.mxu0 0.0
    %736 = vmatpush.msra.mxu0 0.0
    %737 = vmatpush.msra.mxu0 0.0
    %738 = vmatpush.msra.mxu0 0.0
    %739 = vmatpush.msra.mxu0 0.0
    %740 = vmatpush.msra.mxu0 0.0
    %741 = vmatpush.msra.mxu0 0.0
    %742 = vmatpush.msra.mxu0 0.0
    %743 = vmatpush.msra.mxu0 0.0
    %744 = vmatpush.msra.mxu0 0.0
    %745 = vmatpush.msra.mxu0 %v594
    %746 = vmatpush.msra.mxu0 %v593
    %747 = vmatpush.msra.mxu0 %v592
    %748 = vmatpush.msra.mxu0 %v591
    %749 = vmatmul.f32.gmra.mxu0 %v728
    %v750 = vpop.f32.mrf.mxu0
    %v751 = vadd.f32 %v725, %v750
    %752 = vmatmul.f32.gmra.mxu0 %v731
    %v753 = vpop.f32.mrf.mxu0
    %v754 = vadd.f32 %v726, %v753
    %755 = vdwg.mxu0
    %v757 = vperm.slane %v597, 0
    %v759 = vadd.f32 %v751, %v757
    %v760 = vadd.f32 %v754, %v757
    %v762 = vperm.slane %v595, 0
    %v764 = vmul.f32 %v718, %v762
    %v765 = vmul.f32 %v719, %v762
    %v766 = vsel %vm307, %v764, 0.0
    %767 = vadd.xlane.f32.xlu0 %v766
    %v768 = vpop.xlane.xlu0 %767
    %v769 = vsel %vm307, %v765, 0.0
    %770 = vadd.xlane.f32.xlu0 %v769
    %v771 = vpop.xlane.xlu0 %770
    %v772 = vstv %s384
    %v773 = vmul.f32 %v720, %v772
    %v774 = vmul.f32 %v721, %v772
    %v775 = vadd.f32 %v768, %v773
    %v776 = vadd.f32 %v771, %v774
    %v777 = vstv %s385
    %v778 = vadd.f32 %v775, %v777
    %v779 = vadd.f32 %v776, %v777
    %vm780 = vcmp.ge.f32.partialorder %v759, 0.0
    %vm781 = vcmp.ge.f32.partialorder %v760, 0.0
    %v782 = vstv %s382
    %v783 = vmul.f32 %v782, %v759
    %v784 = vmul.f32 %v782, %v760
    %v785 = vsel %vm780, %v759, %v783
    %v786 = vsel %vm781, %v760, %v784
    %vm787 = vcmp.ge.f32.partialorder %v778, 0.0
    %vm788 = vcmp.ge.f32.partialorder %v779, 0.0
    %v789 = vmul.f32 %v782, %v778
    %v790 = vmul.f32 %v782, %v779
    %v791 = vsel %vm787, %v778, %v789
    %v792 = vsel %vm788, %v779, %v790
    %v794 = vsel %vm307, %v785, 0
    %v797 = vsel %vm307, %v786, 0
    %799 = vmatpush.msra.mxu0 0.0
    %800 = vmatpush.msra.mxu0 0.0
    %801 = vmatpush.msra.mxu0 0.0
    %802 = vmatpush.msra.mxu0 0.0
    %803 = vmatpush.msra.mxu0 0.0
    %804 = vmatpush.msra.mxu0 0.0
    %805 = vmatpush.msra.mxu0 0.0
    %806 = vmatpush.msra.mxu0 0.0
    %807 = vmatpush.msra.mxu0 0.0
    %808 = vmatpush.msra.mxu0 0.0
    %809 = vmatpush.msra.mxu0 0.0
    %810 = vmatpush.msra.mxu0 0.0
    %811 = vmatpush.msra.mxu0 %v601
    %812 = vmatpush.msra.mxu0 %v600
    %813 = vmatpush.msra.mxu0 %v599
    %814 = vmatpush.msra.mxu0 %v598
    %815 = vmatmul.f32.gmra.mxu0 %v794
    %v816 = vpop.f32.mrf.mxu0
    %v817 = vadd.f32 0.0, %v816
    %818 = vmatmul.f32.gmra.mxu0 %v797
    %v819 = vpop.f32.mrf.mxu0
    %v820 = vadd.f32 0.0, %v819
    %821 = vdwg.mxu0
    %v822 = vadd.f32 %v583, %v817
    %v823 = vadd.f32 %v584, %v820
    %v825 = vperm.slane %v602, 0
    %v827 = vmul.f32 %v791, %v825
    %v828 = vmul.f32 %v792, %v825
    %v829 = vadd.f32 %v822, %v827
    %v830 = vadd.f32 %v823, %v828
    %s831 = sld [smem:[#allocation2 + $0x9]]
    %s832 = sld [smem:[#allocation2 + $0xa]]
    %s833 = sld [smem:[#allocation2 + $0xb]]
    %s834 = sld [smem:[#allocation2 + $0xc]]
    %s835 = sld [smem:[#allocation2 + $0xd]]
    %s836 = sld [smem:[#allocation2 + $0xe]]
    %s837 = sld [smem:[#allocation2 + $0xf]]
    %s838 = sld [smem:[#allocation2 + $0x10]]
    %v839 = vld [vmem:[#allocation12] sm:$0xff]
    %v840 = vld [vmem:[#allocation12 + $0x8] sm:$0xff]
    %v841 = vld [vmem:[#allocation12 + $0x10] sm:$0xff]
    %v842 = vld [vmem:[#allocation12 + $0x18] sm:$0xff]
    %v843 = vld [vmem:[#allocation14] sm:$0xff]
    %v844 = vld [vmem:[#allocation14 + $0x8] sm:$0xff]
    %v845 = vld [vmem:[#allocation14 + $0x10] sm:$0xff]
    %v846 = vld [vmem:[#allocation14 + $0x18] sm:$0xff]
    %v847 = vld [vmem:[%s43] sm:$0x1]
    %v848 = vld [vmem:[%s45] sm:$0x1]
    %849 = vmatpush.msra.mxu0 0.0
    %850 = vmatpush.msra.mxu0 0.0
    %851 = vmatpush.msra.mxu0 0.0
    %852 = vmatpush.msra.mxu0 0.0
    %853 = vmatpush.msra.mxu0 0.0
    %854 = vmatpush.msra.mxu0 0.0
    %855 = vmatpush.msra.mxu0 0.0
    %856 = vmatpush.msra.mxu0 0.0
    %857 = vmatpush.msra.mxu0 0.0
    %858 = vmatpush.msra.mxu0 0.0
    %859 = vmatpush.msra.mxu0 0.0
    %860 = vmatpush.msra.mxu0 0.0
    %861 = vmatpush.msra.mxu0 %v842
    %862 = vmatpush.msra.mxu0 %v841
    %863 = vmatpush.msra.mxu0 %v840
    %864 = vmatpush.msra.mxu0 %v839
    %865 = vmatmul.f32.gmra.mxu0 %v397
    %v866 = vpop.f32.mrf.mxu0
    %v867 = vadd.f32 0.0, %v866
    %868 = vmatmul.f32.gmra.mxu0 %v400
    %v869 = vpop.f32.mrf.mxu0
    %v870 = vadd.f32 0.0, %v869
    %871 = vdwg.mxu0
    %vm872 = vcmp.ge.f32.partialorder %v867, 0.0
    %vm873 = vcmp.ge.f32.partialorder %v870, 0.0
    %v874 = vstv %s831
    %v875 = vmul.f32 %v874, %v867
    %v876 = vmul.f32 %v874, %v870
    %v877 = vsel %vm872, %v867, %v875
    %v878 = vsel %vm873, %v870, %v876
    %v879 = vtanh.pop %v877
    %v880 = vtanh.pop %v878
    %v881 = vmul.f32 %v371, %v879
    %v882 = vmul.f32 %v374, %v880
    %v883 = vsel %vm307, %v881, 0.0
    %884 = vadd.xlane.f32.xlu0 %v883
    %v885 = vpop.xlane.xlu0 %884
    %v886 = vsel %vm307, %v882, 0.0
    %887 = vadd.xlane.f32.xlu0 %v886
    %v888 = vpop.xlane.xlu0 %887
    %v889 = vmul.f32 %v885, %v448
    %v890 = vmul.f32 %v888, %v448
    %v891 = vsub.f32 %v881, %v889
    %v892 = vsub.f32 %v882, %v890
    %v893 = vmul.f32 %v891, %v891
    %v894 = vmul.f32 %v892, %v892
    %v895 = vsel %vm307, %v893, 0.0
    %896 = vadd.xlane.f32.xlu0 %v895
    %v897 = vpop.xlane.xlu0 %896
    %v898 = vsel %vm307, %v894, 0.0
    %899 = vadd.xlane.f32.xlu0 %v898
    %v900 = vpop.xlane.xlu0 %899
    %v901 = vmul.f32 %v897, %v448
    %v902 = vmul.f32 %v900, %v448
    %v903 = vadd.f32 %v901, 1e-05
    %v904 = vadd.f32 %v902, 1e-05
    %v905 = vrsqrt.pop %v903
    %v906 = vmul.f32 %v905, %v903
    %v907 = vmul.f32 %v906, %v905
    %v908 = vmul.f32 0.5, %v907
    %v909 = vsub.f32 1.5, %v908
    %v910 = vmul.f32 %v905, %v909
    %vm911 = vweird.f32 %v903
    %vm912 = vweird.f32 %v905
    %vm913 = vmor %vm911, %vm912
    %v914 = vsel %vm913, %v905, %v910
    %v915 = vrsqrt.pop %v904
    %v916 = vmul.f32 %v915, %v904
    %v917 = vmul.f32 %v916, %v915
    %v918 = vmul.f32 0.5, %v917
    %v919 = vsub.f32 1.5, %v918
    %v920 = vmul.f32 %v915, %v919
    %vm921 = vweird.f32 %v904
    %vm922 = vweird.f32 %v915
    %vm923 = vmor %vm921, %vm922
    %v924 = vsel %vm923, %v915, %v920
    %v925 = vmul.f32 %v891, %v914
    %v926 = vmul.f32 %v892, %v924
    %v928 = vperm.slane %v847, 0
    %v931 = vsel %vm307, %v925, 0
    %v934 = vsel %vm307, %v926, 0
    %936 = vmatpush.msra.mxu0 0.0
    %937 = vmatpush.msra.mxu0 0.0
    %938 = vmatpush.msra.mxu0 0.0
    %939 = vmatpush.msra.mxu0 0.0
    %940 = vmatpush.msra.mxu0 0.0
    %941 = vmatpush.msra.mxu0 0.0
    %942 = vmatpush.msra.mxu0 0.0
    %943 = vmatpush.msra.mxu0 0.0
    %944 = vmatpush.msra.mxu0 0.0
    %945 = vmatpush.msra.mxu0 0.0
    %946 = vmatpush.msra.mxu0 0.0
    %947 = vmatpush.msra.mxu0 0.0
    %948 = vmatpush.msra.mxu0 %v846
    %949 = vmatpush.msra.mxu0 %v845
    %950 = vmatpush.msra.mxu0 %v844
    %951 = vmatpush.msra.mxu0 %v843
    %952 = vmatmul.f32.gmra.mxu0 %v931
    %v953 = vpop.f32.mrf.mxu0
    %v954 = vadd.f32 %v928, %v953
    %955 = vmatmul.f32.gmra.mxu0 %v934
    %v956 = vpop.f32.mrf.mxu0
    %v957 = vadd.f32 %v928, %v956
    %958 = vdwg.mxu0
    %vm959 = vcmp.ge.f32.partialorder %v954, 0.0
    %vm960 = vcmp.ge.f32.partialorder %v957, 0.0
    %v961 = vstv %s832
    %v962 = vmul.f32 %v961, %v954
    %v963 = vmul.f32 %v961, %v957
    %v964 = vsel %vm959, %v954, %v962
    %v965 = vsel %vm960, %v957, %v963
    %v967 = vperm.slane %v848, 0
    %v969 = vmul.f32 %v964, %v967
    %v970 = vmul.f32 %v965, %v967
    %v971 = vsel %vm307, %v969, 0.0
    %972 = vadd.xlane.f32.xlu0 %v971
    %v973 = vpop.xlane.xlu0 %972
    %v974 = vsel %vm307, %v970, 0.0
    %975 = vadd.xlane.f32.xlu0 %v974
    %v976 = vpop.xlane.xlu0 %975
    %v977 = vstv %s833
    %v978 = vadd.f32 %v973, %v977
    %v979 = vadd.f32 %v976, %v977
    %v980 = vsub.f32 0.0, %v978
    %v981 = vsub.f32 0.0, %v979
    %v982 = vmul.f32 %v980, 1.442695
    %v983 = vpow.pop %v982
    %v984 = vmul.f32 %v981, 1.442695
    %v985 = vpow.pop %v984
    %v986 = vadd.f32 %v983, 1.0
    %v987 = vadd.f32 %v985, 1.0
    %v988 = vrcp.pop %v986
    %v989 = vmul.f32 %v986, %v988
    %v990 = vsub.f32 1.0, %v989
    %v991 = vmul.f32 %v988, %v990
    %v992 = vadd.f32 %v988, %v991
    %vm993 = vweird.f32 %v986
    %vm994 = vweird.f32 %v988
    %vm995 = vmor %vm993, %vm994
    %v996 = vsel %vm995, %v988, %v992
    %v997 = vand.u32 2147483647, %v986
    %vm998 = vcmp.eq.f32.partialorder %v997, 8.507059e+37
    %v999 = vand.u32 %v986, 2147483648
    %v1000 = vor.u32 1.1754944e-38, %v999
    %v1001 = vsel %vm998, %v1000, %v996
    %v1002 = vmul.f32 1.0, %v1001
    %v1003 = vrcp.pop %v987
    %v1004 = vmul.f32 %v987, %v1003
    %v1005 = vsub.f32 1.0, %v1004
    %v1006 = vmul.f32 %v1003, %v1005
    %v1007 = vadd.f32 %v1003, %v1006
    %vm1008 = vweird.f32 %v987
    %vm1009 = vweird.f32 %v1003
    %vm1010 = vmor %vm1008, %vm1009
    %v1011 = vsel %vm1010, %v1003, %v1007
    %v1012 = vand.u32 2147483647, %v987
    %vm1013 = vcmp.eq.f32.partialorder %v1012, 8.507059e+37
    %v1014 = vand.u32 %v987, 2147483648
    %v1015 = vor.u32 1.1754944e-38, %v1014
    %v1016 = vsel %vm1013, %v1015, %v1011
    %v1017 = vmul.f32 1.0, %v1016
    %vm1018 = vcmp.eq.s32.totalorder %v377, 3
    %v1019 = vsel %vm1018, 1, 0
    %vm1020 = vcmp.eq.s32.totalorder %v1019, 1
    %v1021 = vsel %vm1020, %v978, 0.0
    %v1022 = vsel %vm1020, %v979, 0.0
    %v1023 = vadd.f32 %v829, %v1021
    %v1024 = vadd.f32 %v830, %v1022
    %v1025 = vld [vmem:[#allocation15] sm:$0xff]
    %v1026 = vld [vmem:[#allocation15 + $0x8] sm:$0xff]
    %v1027 = vld [vmem:[#allocation15 + $0x10] sm:$0xff]
    %v1028 = vld [vmem:[#allocation15 + $0x18] sm:$0xff]
    %v1029 = vld [vmem:[%s49] sm:$0x1]
    %v1030 = vld [vmem:[%s51] sm:$0x1]
    %v1031 = vld [vmem:[#allocation17] sm:$0xff]
    %v1032 = vld [vmem:[#allocation17 + $0x8] sm:$0xff]
    %v1033 = vld [vmem:[#allocation17 + $0x10] sm:$0xff]
    %v1034 = vld [vmem:[#allocation17 + $0x18] sm:$0xff]
    %v1035 = vld [vmem:[%s55] sm:$0x1]
    %v1036 = vld [vmem:[%s57] sm:$0x1]
    %v1037 = vld [vmem:[%s59] sm:$0x1]
    %v1038 = vld [vmem:[%s61] sm:$0xff]
    %v1039 = vld [vmem:[%s61 + $0x8] sm:$0xff]
    %v1040 = vld [vmem:[%s61 + $0x10] sm:$0xff]
    %v1041 = vld [vmem:[%s61 + $0x18] sm:$0xff]
    %v1042 = vld [vmem:[%s63] sm:$0x1]
    %v1044 = vperm.slane %v1030, 0
    %v1046 = vmul.f32 %v1002, %v1044
    %v1047 = vmul.f32 %v1017, %v1044
    %1048 = vmatpush.msra.mxu0 0.0
    %1049 = vmatpush.msra.mxu0 0.0
    %1050 = vmatpush.msra.mxu0 0.0
    %1051 = vmatpush.msra.mxu0 0.0
    %1052 = vmatpush.msra.mxu0 0.0
    %1053 = vmatpush.msra.mxu0 0.0
    %1054 = vmatpush.msra.mxu0 0.0
    %1055 = vmatpush.msra.mxu0 0.0
    %1056 = vmatpush.msra.mxu0 0.0
    %1057 = vmatpush.msra.mxu0 0.0
    %1058 = vmatpush.msra.mxu0 0.0
    %1059 = vmatpush.msra.mxu0 0.0
    %1060 = vmatpush.msra.mxu0 %v1028
    %1061 = vmatpush.msra.mxu0 %v1027
    %1062 = vmatpush.msra.mxu0 %v1026
    %1063 = vmatpush.msra.mxu0 %v1025
    %1064 = vmatmul.f32.gmra.mxu0 %v397
    %v1065 = vpop.f32.mrf.mxu0
    %v1066 = vadd.f32 %v1046, %v1065
    %1067 = vmatmul.f32.gmra.mxu0 %v400
    %v1068 = vpop.f32.mrf.mxu0
    %v1069 = vadd.f32 %v1047, %v1068
    %1070 = vdwg.mxu0
    %v1072 = vperm.slane %v1029, 0
    %v1074 = vmul.f32 %v371, %v1072
    %v1075 = vmul.f32 %v374, %v1072
    %v1076 = vsel %vm307, %v1074, 0.0
    %1077 = vadd.xlane.f32.xlu0 %v1076
    %v1078 = vpop.xlane.xlu0 %1077
    %v1079 = vsel %vm307, %v1075, 0.0
    %1080 = vadd.xlane.f32.xlu0 %v1079
    %v1081 = vpop.xlane.xlu0 %1080
    %v1082 = vstv %s836
    %v1083 = vmul.f32 %v1002, %v1082
    %v1084 = vmul.f32 %v1017, %v1082
    %v1085 = vadd.f32 %v1078, %v1083
    %v1086 = vadd.f32 %v1081, %v1084
    %vm1087 = vcmp.ge.f32.partialorder %v1066, 0.0
    %vm1088 = vcmp.ge.f32.partialorder %v1069, 0.0
    %v1089 = vstv %s834
    %v1090 = vmul.f32 %v1089, %v1066
    %v1091 = vmul.f32 %v1089, %v1069
    %v1092 = vsel %vm1087, %v1066, %v1090
    %v1093 = vsel %vm1088, %v1069, %v1091
    %v1094 = vtanh.pop %v1092
    %v1095 = vtanh.pop %v1093
    %vm1096 = vcmp.ge.f32.partialorder %v1085, 0.0
    %vm1097 = vcmp.ge.f32.partialorder %v1086, 0.0
    %v1098 = vmul.f32 %v1089, %v1085
    %v1099 = vmul.f32 %v1089, %v1086
    %v1100 = vsel %vm1096, %v1085, %v1098
    %v1101 = vsel %vm1097, %v1086, %v1099
    %v1102 = vtanh.pop %v1100
    %v1103 = vtanh.pop %v1101
    %v1104 = vmul.f32 %v371, %v1094
    %v1105 = vmul.f32 %v374, %v1095
    %v1106 = vmul.f32 %v1002, %v1102
    %v1107 = vmul.f32 %v1017, %v1103
    %v1108 = vsel %vm307, %v1104, 0.0
    %1109 = vadd.xlane.f32.xlu0 %v1108
    %v1110 = vpop.xlane.xlu0 %1109
    %v1111 = vsel %vm307, %v1105, 0.0
    %1112 = vadd.xlane.f32.xlu0 %v1111
    %v1113 = vpop.xlane.xlu0 %1112
    %v1114 = vadd.f32 %v1110, %v1106
    %v1115 = vadd.f32 %v1113, %v1107
    %v1116 = vmul.f32 %v1114, 0.030303031
    %v1117 = vmul.f32 %v1115, 0.030303031
    %v1118 = vsub.f32 %v1104, %v1116
    %v1119 = vsub.f32 %v1105, %v1117
    %v1120 = vmul.f32 %v1118, %v1118
    %v1121 = vmul.f32 %v1119, %v1119
    %v1122 = vsel %vm307, %v1120, 0.0
    %1123 = vadd.xlane.f32.xlu0 %v1122
    %v1124 = vpop.xlane.xlu0 %1123
    %v1125 = vsel %vm307, %v1121, 0.0
    %1126 = vadd.xlane.f32.xlu0 %v1125
    %v1127 = vpop.xlane.xlu0 %1126
    %v1128 = vsub.f32 %v1106, %v1116
    %v1129 = vsub.f32 %v1107, %v1117
    %v1130 = vmul.f32 %v1128, %v1128
    %v1131 = vmul.f32 %v1129, %v1129
    %v1132 = vadd.f32 %v1124, %v1130
    %v1133 = vadd.f32 %v1127, %v1131
    %v1134 = vmul.f32 %v1132, 0.030303031
    %v1135 = vmul.f32 %v1133, 0.030303031
    %v1136 = vadd.f32 %v1134, 1e-05
    %v1137 = vadd.f32 %v1135, 1e-05
    %v1138 = vrsqrt.pop %v1136
    %v1139 = vmul.f32 %v1138, %v1136
    %v1140 = vmul.f32 %v1139, %v1138
    %v1141 = vmul.f32 0.5, %v1140
    %v1142 = vsub.f32 1.5, %v1141
    %v1143 = vmul.f32 %v1138, %v1142
    %vm1144 = vweird.f32 %v1136
    %vm1145 = vweird.f32 %v1138
    %vm1146 = vmor %vm1144, %vm1145
    %v1147 = vsel %vm1146, %v1138, %v1143
    %v1148 = vrsqrt.pop %v1137
    %v1149 = vmul.f32 %v1148, %v1137
    %v1150 = vmul.f32 %v1149, %v1148
    %v1151 = vmul.f32 0.5, %v1150
    %v1152 = vsub.f32 1.5, %v1151
    %v1153 = vmul.f32 %v1148, %v1152
    %vm1154 = vweird.f32 %v1137
    %vm1155 = vweird.f32 %v1148
    %vm1156 = vmor %vm1154, %vm1155
    %v1157 = vsel %vm1156, %v1148, %v1153
    %v1158 = vmul.f32 %v1118, %v1147
    %v1159 = vmul.f32 %v1119, %v1157
    %v1160 = vmul.f32 %v1128, %v1147
    %v1161 = vmul.f32 %v1129, %v1157
    %v1163 = vperm.slane %v1036, 0
    %v1165 = vmul.f32 %v1160, %v1163
    %v1166 = vmul.f32 %v1161, %v1163
    %v1168 = vsel %vm307, %v1158, 0
    %v1171 = vsel %vm307, %v1159, 0
    %1173 = vmatpush.msra.mxu0 0.0
    %1174 = vmatpush.msra.mxu0 0.0
    %1175 = vmatpush.msra.mxu0 0.0
    %1176 = vmatpush.msra.mxu0 0.0
    %1177 = vmatpush.msra.mxu0 0.0
    %1178 = vmatpush.msra.mxu0 0.0
    %1179 = vmatpush.msra.mxu0 0.0
    %1180 = vmatpush.msra.mxu0 0.0
    %1181 = vmatpush.msra.mxu0 0.0
    %1182 = vmatpush.msra.mxu0 0.0
    %1183 = vmatpush.msra.mxu0 0.0
    %1184 = vmatpush.msra.mxu0 0.0
    %1185 = vmatpush.msra.mxu0 %v1034
    %1186 = vmatpush.msra.mxu0 %v1033
    %1187 = vmatpush.msra.mxu0 %v1032
    %1188 = vmatpush.msra.mxu0 %v1031
    %1189 = vmatmul.f32.gmra.mxu0 %v1168
    %v1190 = vpop.f32.mrf.mxu0
    %v1191 = vadd.f32 %v1165, %v1190
    %1192 = vmatmul.f32.gmra.mxu0 %v1171
    %v1193 = vpop.f32.mrf.mxu0
    %v1194 = vadd.f32 %v1166, %v1193
    %1195 = vdwg.mxu0
    %v1197 = vperm.slane %v1037, 0
    %v1199 = vadd.f32 %v1191, %v1197
    %v1200 = vadd.f32 %v1194, %v1197
    %v1202 = vperm.slane %v1035, 0
    %v1204 = vmul.f32 %v1158, %v1202
    %v1205 = vmul.f32 %v1159, %v1202
    %v1206 = vsel %vm307, %v1204, 0.0
    %1207 = vadd.xlane.f32.xlu0 %v1206
    %v1208 = vpop.xlane.xlu0 %1207
    %v1209 = vsel %vm307, %v1205, 0.0
    %1210 = vadd.xlane.f32.xlu0 %v1209
    %v1211 = vpop.xlane.xlu0 %1210
    %v1212 = vstv %s837
    %v1213 = vmul.f32 %v1160, %v1212
    %v1214 = vmul.f32 %v1161, %v1212
    %v1215 = vadd.f32 %v1208, %v1213
    %v1216 = vadd.f32 %v1211, %v1214
    %v1217 = vstv %s838
    %v1218 = vadd.f32 %v1215, %v1217
    %v1219 = vadd.f32 %v1216, %v1217
    %vm1220 = vcmp.ge.f32.partialorder %v1199, 0.0
    %vm1221 = vcmp.ge.f32.partialorder %v1200, 0.0
    %v1222 = vstv %s835
    %v1223 = vmul.f32 %v1222, %v1199
    %v1224 = vmul.f32 %v1222, %v1200
    %v1225 = vsel %vm1220, %v1199, %v1223
    %v1226 = vsel %vm1221, %v1200, %v1224
    %vm1227 = vcmp.ge.f32.partialorder %v1218, 0.0
    %vm1228 = vcmp.ge.f32.partialorder %v1219, 0.0
    %v1229 = vmul.f32 %v1222, %v1218
    %v1230 = vmul.f32 %v1222, %v1219
    %v1231 = vsel %vm1227, %v1218, %v1229
    %v1232 = vsel %vm1228, %v1219, %v1230
    %v1234 = vsel %vm307, %v1225, 0
    %v1237 = vsel %vm307, %v1226, 0
    %1239 = vmatpush.msra.mxu0 0.0
    %1240 = vmatpush.msra.mxu0 0.0
    %1241 = vmatpush.msra.mxu0 0.0
    %1242 = vmatpush.msra.mxu0 0.0
    %1243 = vmatpush.msra.mxu0 0.0
    %1244 = vmatpush.msra.mxu0 0.0
    %1245 = vmatpush.msra.mxu0 0.0
    %1246 = vmatpush.msra.mxu0 0.0
    %1247 = vmatpush.msra.mxu0 0.0
    %1248 = vmatpush.msra.mxu0 0.0
    %1249 = vmatpush.msra.mxu0 0.0
    %1250 = vmatpush.msra.mxu0 0.0
    %1251 = vmatpush.msra.mxu0 %v1041
    %1252 = vmatpush.msra.mxu0 %v1040
    %1253 = vmatpush.msra.mxu0 %v1039
    %1254 = vmatpush.msra.mxu0 %v1038
    %1255 = vmatmul.f32.gmra.mxu0 %v1234
    %v1256 = vpop.f32.mrf.mxu0
    %v1257 = vadd.f32 0.0, %v1256
    %1258 = vmatmul.f32.gmra.mxu0 %v1237
    %v1259 = vpop.f32.mrf.mxu0
    %v1260 = vadd.f32 0.0, %v1259
    %1261 = vdwg.mxu0
    %v1262 = vadd.f32 %v1023, %v1257
    %v1263 = vadd.f32 %v1024, %v1260
    %v1265 = vperm.slane %v1042, 0
    %v1267 = vmul.f32 %v1231, %v1265
    %v1268 = vmul.f32 %v1232, %v1265
    %v1269 = vadd.f32 %v1262, %v1267
    %v1270 = vadd.f32 %v1263, %v1268
    %v1271 = vld [vmem:[%s65] sm:$0x1]
    %v1273 = vperm.slane %v1271, 0
    %v1275 = vadd.f32 %v1269, %v1273
    %v1276 = vadd.f32 %v1270, %v1273
    %vm1277 = vcmask 48128
    %1278 = vst.msk [vmem:[%s67] sm:$0xff] %vm1277, %v1275
    %1279 = vst.msk [vmem:[%s67 + $0x8] sm:$0xff] %vm1277, %v1276
    // Predicated region
    $region174: #{som_predictor_v2_forward.1} parent=1 // pred_check
      _
    $region175: #{som_predictor_v2_forward.1} parent=1 // pred_check_branch
      %1281 = sbr.rel (0) target = $region177
    $region176: #{som_predictor_v2_forward.1} parent=1 // pred_region
      _
    $region177: #{som_predictor_v2_forward.1} parent=1 // pred_fallthru
      _
    // Predicated region
    $region178: #{som_predictor_v2_forward.1} parent=1 // pred_check
      _
    $region179: #{som_predictor_v2_forward.1} parent=1 // pred_check_branch
      %1283 = sbr.rel (0) target = $region181
    $region180: #{som_predictor_v2_forward.1} parent=1 // pred_region
      _
    $region181: #{som_predictor_v2_forward.1} parent=1 // pred_fallthru
      _
    %1284 = vsyncpa [#allocation3], 1
    %1285 = vsyncpa [#allocation7], 1
    %1286 = vsyncpa [#allocation10], 1
    %1287 = vsyncpa [#allocation13], 1
    %1288 = vsyncpa [#allocation16], 1
    %1289 = vsyncpa [#allocation4], 1

</llo_original>
